<compile_context>
chip_gen: v7x
topology: tpu7x:2x2x1
jax: 0.10.0
libtpu: 0.0.40
codegen_flags: <defaults>
</compile_context>

<pallas_src>
import functools

import jax
import jax.numpy as jnp
from jax.experimental import pallas as pl
from jax.experimental.pallas import tpu as pltpu


# ---------------------------------------------------------------------------
# Small helpers
# ---------------------------------------------------------------------------

def _round_up(x, m):
    return (x + m - 1) // m * m


def _vmem_limit_bytes():
    """Scoped-VMEM limit to request: physical capacity minus headroom."""
    try:
        cap = int(pltpu.get_tpu_info().vmem_capacity_bytes)
    except Exception:
        cap = 64 << 20            # conservative default (v7x per-core VMEM)
    return max(cap - (16 << 20), 16 << 20)


def _fused_vmem_estimate(cin, cout, hw):
    bpe = 2                                   # bf16 activations
    act = 2 * 2 * cin * hw * bpe              # fsp/fcp, double buffered
    out = 2 * cout * hw * bpe                 # output, double buffered
    ab = 2 * cin * hw * bpe                   # concat scratch
    f32 = (cout * hw + 2 * cin * hw) * 4      # feat (f32) + gating temporaries
    return act + out + ab + f32


def _tiled_vmem_estimate(cin, cout, hw_t):
    return _fused_vmem_estimate(cin, cout, hw_t)


def _pick_hw_tile(hw, cin, cout, budget, max_tile):
    """Largest 128-multiple spatial tile that fits the VMEM budget."""
    hw128 = _round_up(hw, 128)
    t = min(max(128, max_tile - max_tile % 128), hw128)
    t = max(t - t % 128, 128)
    while t > 128 and _tiled_vmem_estimate(cin, cout, t) > budget:
        t -= 128
    return t


def _cse_gate_xla(pooled, w1, b1, w2, b2):
    h = jnp.maximum(pooled @ w1 + b1, 0.0)
    return jax.nn.sigmoid(h @ w2 + b2)


def _prep_fusion_weights(params, compute_dtype):
    f32 = jnp.float32
    cout = params["w_conv"].shape[1]
    w_fold = params["w_conv"].astype(f32) * params["bn_scale"].astype(f32)   # (2Cin, Cout)
    wcat = w_fold.T.astype(compute_dtype)                                    # (Cout, 2Cin)
    bn_bias = params["bn_bias"].astype(f32).reshape(cout, 1)                 # (Cout, 1)
    return wcat, bn_bias


def _scse_kernel_weights(params, prefix):
    """cSE MLP weights laid out for in-kernel VPU broadcast + reduce (no transposes
    or tiny matmuls inside the kernel)."""
    f32 = jnp.float32
    w1 = params[f"{prefix}_w1"].astype(f32)                   # (C, Cm)
    b1 = params[f"{prefix}_b1"].astype(f32)                   # (1, Cm)
    w2t = params[f"{prefix}_w2"].astype(f32).T                # (C, Cm)
    b2c = params[f"{prefix}_b2"].astype(f32).reshape(-1, 1)   # (C, 1)
    ws = params[f"{prefix}_ws"].astype(f32)                   # (C, 1)
    return w1, b1, w2t, b2c, ws


# ---------------------------------------------------------------------------
# Fully fused single-pass kernel (one grid step per batch element)
# ---------------------------------------------------------------------------

def _fused_kernel(fsp_ref, fcp_ref,
                  s1w1, s1b1, s1w2t, s1b2, s1ws,
                  s2w1, s2b1, s2w2t, s2b2, s2ws,
                  s3w1, s3b1, s3w2t, s3b2, s3ws,
                  wcat_ref, bnb_ref, sseb_ref,
                  out_ref, ab_ref, *, inv_hw):
    f32 = jnp.float32
    x1 = fsp_ref[0]                              # (Cin, HW) bf16
    x2 = fcp_ref[0]
    cin = x1.shape[0]

    def cse(x, w1, b1, w2t, b2):
        # channel gate (C, 1): sigmoid(W2 @ relu(W1 @ mean(x)))
        pooled = jnp.sum(x.astype(f32), axis=1, keepdims=True) * inv_hw          # (C, 1)
        h = jnp.maximum(jnp.sum(pooled * w1[...], axis=0, keepdims=True)
                        + b1[...], 0.0)                                           # (1, Cm)
        return jax.nn.sigmoid(jnp.sum(w2t[...] * h, axis=1, keepdims=True)
                              + b2[...])                                          # (C, 1)

    def sse(x, ws, b):
        # spatial gate (1, HW): sigmoid(<ws, x[:, p]> + b)  (VPU mul + sublane reduce)
        return jax.nn.sigmoid(jnp.sum(x.astype(f32) * ws[...], axis=0,
                                      keepdims=True) + b)

    g1 = cse(x1, s1w1, s1b1, s1w2t, s1b2)
    g2 = cse(x2, s2w1, s2b1, s2w2t, s2b2)
    sse1 = sse(x1, s1ws, sseb_ref[0])
    sse2 = sse(x2, s2ws, sseb_ref[1])

    # Fused SCSE apply (x*cse + x*sse == x*(cse + sse)); gate cast to bf16.
    # The gated slabs go straight into the (2Cin, HW) scratch so the (virtual)
    # channel concat is a pair of static-slice stores, feeding a single matmul.
    ab_ref[0:cin, :] = x1 * (g1 + sse1).astype(x1.dtype)
    ab_ref[cin:2 * cin, :] = x2 * (g2 + sse2).astype(x2.dtype)

    # 1x1 conv over the concat as ONE (Cout, 2Cin) x (2Cin, HW) matmul; BN scale
    # is pre-folded into wcat, only the BN bias add + ReLU remain.
    feat = jnp.dot(wcat_ref[...], ab_ref[...], preferred_element_type=f32)
    feat = jnp.maximum(feat + bnb_ref[...], 0.0)                                  # (Cout, HW)

    # Final SCSE on the fused feature (all VMEM-resident, no HBM round-trip).
    g3 = cse(feat, s3w1, s3b1, s3w2t, s3b2)
    sse3 = sse(feat, s3ws, sseb_ref[2])
    out_ref[0] = (feat * (g3 + sse3)).astype(out_ref.dtype)


def _run_fused(fsp, fcp, params, wcat, bn_bias, N, Cin, Cout, H, W, HW,
               compute_dtype, vmem_limit):
    f32 = jnp.float32
    s1 = _scse_kernel_weights(params, "s1")
    s2 = _scse_kernel_weights(params, "s2")
    s3 = _scse_kernel_weights(params, "s3")
    sse_b = jnp.stack([params["s1_bs"][0, 0], params["s2_bs"][0, 0],
                       params["s3_bs"][0, 0]]).astype(f32)        # (3,), lives in SMEM

    act_spec = lambda C: pl.BlockSpec((1, C, HW), lambda n: (n, 0, 0))
    full2d = lambda p: pl.BlockSpec(p.shape, lambda n: (0, 0))
    smem_spec = pl.BlockSpec(memory_space=pltpu.MemorySpace.SMEM)

    w_args, w_specs = [], []
    for s in (s1, s2, s3):
        for w in s:
            w_args.append(w)
            w_specs.append(full2d(w))

    flops = int(2 * N * (2 * Cin) * Cout * HW + 12 * N * (Cin + Cout) * HW)
    bytes_accessed = int((2 * N * Cin * HW + N * Cout * HW) * 2)
    transcendentals = int(3 * N * HW + 3 * N * (Cin + Cout))

    out = pl.pallas_call(
        functools.partial(_fused_kernel, inv_hw=1.0 / HW),
        out_shape=jax.ShapeDtypeStruct((N, Cout, HW), compute_dtype),
        grid_spec=pltpu.PrefetchScalarGridSpec(
            num_scalar_prefetch=0,
            grid=(N,),
            in_specs=[act_spec(Cin), act_spec(Cin),
                      *w_specs,
                      full2d(wcat), full2d(bn_bias),
                      smem_spec],
            out_specs=pl.BlockSpec((1, Cout, HW), lambda n: (n, 0, 0)),
            scratch_shapes=[pltpu.VMEM((2 * Cin, HW), compute_dtype)]),
        compiler_params=pltpu.CompilerParams(
            dimension_semantics=("parallel",),
            vmem_limit_bytes=vmem_limit),
        cost_estimate=pl.CostEstimate(flops=flops, transcendentals=transcendentals,
                                      bytes_accessed=bytes_accessed),
    )(fsp, fcp, *w_args, wcat, bn_bias, sse_b)

    return out.reshape(N, Cout, H, W)


# ---------------------------------------------------------------------------
# Tiled two-pass fallback (large HW that does not fit VMEM per batch)
# ---------------------------------------------------------------------------

def _fuse_tiled_kernel(fsp_ref, fcp_ref, cse_ref, ssew_ref, wcat_ref, bnb_ref, sseb_ref,
                       feat_ref, psum_ref, ab_ref, *, hw_valid, need_mask):
    f32 = jnp.float32
    t = pl.program_id(1)

    x1 = fsp_ref[0]                              # (Cin, hw_t) bf16
    x2 = fcp_ref[0]
    cin = x1.shape[0]
    hw_t = x1.shape[1]

    g = cse_ref[0]                               # (Cin, 2) f32 precomputed cSE gates
    ws = ssew_ref[...]                           # (Cin, 2) f32 sSE weights

    sse1 = jax.nn.sigmoid(jnp.sum(x1.astype(f32) * ws[:, 0:1], axis=0,
                                  keepdims=True) + sseb_ref[0])
    sse2 = jax.nn.sigmoid(jnp.sum(x2.astype(f32) * ws[:, 1:2], axis=0,
                                  keepdims=True) + sseb_ref[1])

    # bf16 gating; gated slabs stored into the (2Cin, hw_t) scratch (folded concat).
    ab_ref[0:cin, :] = x1 * (g[:, 0:1] + sse1).astype(x1.dtype)
    ab_ref[cin:2 * cin, :] = x2 * (g[:, 1:2] + sse2).astype(x2.dtype)

    feat = jnp.dot(wcat_ref[...], ab_ref[...], preferred_element_type=f32)
    feat = jnp.maximum(feat + bnb_ref[...], 0.0)                 # (Cout, hw_t)
    feat_ref[0] = feat.astype(feat_ref.dtype)

    # Spatial-sum accumulator for the final cSE pool (resident across the hw axis).
    @pl.when(t == 0)
    def _():
        psum_ref[0] = jnp.zeros_like(psum_ref[0])

    if need_mask:
        lane = t * hw_t + jax.lax.broadcasted_iota(jnp.int32, feat.shape, 1)
        feat = jnp.where(lane < hw_valid, feat, 0.0)             # drop padded lanes
    psum_ref[0] += jnp.sum(feat, axis=1, keepdims=True)          # (Cout, 1)


def _scse_out_kernel(feat_ref, g3_ref, ws3_ref, bs3_ref, out_ref):
    f32 = jnp.float32
    f = feat_ref[0]                                              # (Cout, hw_t) bf16
    sse3 = jax.nn.sigmoid(jnp.sum(f.astype(f32) * ws3_ref[...], axis=0,
                                  keepdims=True) + bs3_ref[0])
    out_ref[0] = f * (g3_ref[0] + sse3).astype(f.dtype)


def _run_tiled(fsp, fcp, params, wcat, bn_bias, N, Cin, Cout, H, W, HW,
               compute_dtype, vmem_limit, budget, max_hw_tile, fsp_mean, fcp_mean):
    f32 = jnp.float32

    # cSE gates of the two inputs need global means.  Accept precomputed means from
    # the producer (avoids re-reading fsp/fcp from HBM); otherwise compute in XLA.
    m1 = jnp.mean(fsp, axis=2, dtype=f32) if fsp_mean is None else fsp_mean.astype(f32)
    m2 = jnp.mean(fcp, axis=2, dtype=f32) if fcp_mean is None else fcp_mean.astype(f32)
    g1 = _cse_gate_xla(m1, params["s1_w1"], params["s1_b1"], params["s1_w2"], params["s1_b2"])
    g2 = _cse_gate_xla(m2, params["s2_w1"], params["s2_b1"], params["s2_w2"], params["s2_b2"])
    cse_g = jnp.stack([g1, g2], axis=-1).astype(f32)             # (N, Cin, 2)

    sse_w = jnp.concatenate([params["s1_ws"], params["s2_ws"]], axis=1).astype(f32)  # (Cin, 2)
    sse_b = jnp.stack([params["s1_bs"][0, 0], params["s2_bs"][0, 0]]).astype(f32)    # (2,)

    hw_t = _pick_hw_tile(HW, Cin, Cout, budget, max_hw_tile)
    hw_pad = _round_up(HW, hw_t)
    n_hw = hw_pad // hw_t
    if hw_pad != HW:                                             # lane-dense padded layout
        pad = [(0, 0), (0, 0), (0, hw_pad - HW)]
        fsp = jnp.pad(fsp, pad)
        fcp = jnp.pad(fcp, pad)

    act_spec = lambda C: pl.BlockSpec((1, C, hw_t), lambda n, t: (n, 0, t))
    full2d = lambda p: pl.BlockSpec(p.shape, lambda n, t: (0, 0))
    smem_spec = pl.BlockSpec(memory_space=pltpu.MemorySpace.SMEM)

    kernel1 = functools.partial(_fuse_tiled_kernel, hw_valid=HW, need_mask=(hw_pad != HW))
    feat, psum = pl.pallas_call(
        kernel1,
        out_shape=(jax.ShapeDtypeStruct((N, Cout, hw_pad), compute_dtype),
                   jax.ShapeDtypeStruct((N, Cout, 1), f32)),
        grid_spec=pltpu.PrefetchScalarGridSpec(
            num_scalar_prefetch=0,
            grid=(N, n_hw),
            in_specs=[act_spec(Cin), act_spec(Cin),
                      pl.BlockSpec((1, Cin, 2), lambda n, t: (n, 0, 0)),
                      full2d(sse_w), full2d(wcat), full2d(bn_bias),
                      smem_spec],
            out_specs=(pl.BlockSpec((1, Cout, hw_t), lambda n, t: (n, 0, t)),
                       pl.BlockSpec((1, Cout, 1), lambda n, t: (n, 0, 0))),
            scratch_shapes=[pltpu.VMEM((2 * Cin, hw_t), compute_dtype)]),
        compiler_params=pltpu.CompilerParams(
            dimension_semantics=("parallel", "arbitrary"),
            vmem_limit_bytes=vmem_limit),
    )(fsp, fcp, cse_g, sse_w, wcat, bn_bias, sse_b)
    # TODO(synk): v7x megacore split over HW with per-core partial psums for N == 1.

    pooled3 = psum[:, :, 0] / float(HW)                          # (N, Cout)
    g3 = _cse_gate_xla(pooled3, params["s3_w1"], params["s3_b1"],
                       params["s3_w2"], params["s3_b2"]).astype(f32)[:, :, None]
    ws3 = params["s3_ws"].astype(f32)                            # (Cout, 1)
    bs3 = params["s3_bs"].reshape(-1).astype(f32)                # (1,), SMEM

    out = pl.pallas_call(
        _scse_out_kernel,
        out_shape=jax.ShapeDtypeStruct((N, Cout, hw_pad), compute_dtype),
        grid_spec=pltpu.PrefetchScalarGridSpec(
            num_scalar_prefetch=0,
            grid=(N, n_hw),
            in_specs=[pl.BlockSpec((1, Cout, hw_t), lambda n, t: (n, 0, t)),
                      pl.BlockSpec((1, Cout, 1), lambda n, t: (n, 0, 0)),
                      full2d(ws3), smem_spec],
            out_specs=pl.BlockSpec((1, Cout, hw_t), lambda n, t: (n, 0, t))),
        compiler_params=pltpu.CompilerParams(
            dimension_semantics=("parallel", "parallel"),
            vmem_limit_bytes=vmem_limit),
    )(feat, g3, ws3, bs3)

    if hw_pad != HW:
        out = out[:, :, :HW]
    return out.reshape(N, Cout, H, W)


# ---------------------------------------------------------------------------
# Public wrapper
# ---------------------------------------------------------------------------

def feature_fusion_scse_v2(fsp_nchw, fcp_nchw, params, *,
                           compute_dtype=jnp.bfloat16,
                           fsp_mean=None, fcp_mean=None,
                           force_tiled=False, max_hw_tile=4096):
    N, Cin, H, W = fsp_nchw.shape
    assert fcp_nchw.shape == fsp_nchw.shape
    HW = H * W
    Cout = params["w_conv"].shape[1]

    # NCHW -> (N, C, HW): a pure reshape, no transpose / extra HBM pass.
    fsp = fsp_nchw.reshape(N, Cin, HW).astype(compute_dtype)
    fcp = fcp_nchw.reshape(N, Cin, HW).astype(compute_dtype)

    wcat, bn_bias = _prep_fusion_weights(params, compute_dtype)

    vmem_limit = _vmem_limit_bytes()
    budget = int(0.7 * vmem_limit)
    use_fused = (not force_tiled) and _fused_vmem_estimate(Cin, Cout, HW) <= budget

    if use_fused:
        return _run_fused(fsp, fcp, params, wcat, bn_bias, N, Cin, Cout, H, W, HW,
                          compute_dtype, vmem_limit)
    return _run_tiled(fsp, fcp, params, wcat, bn_bias, N, Cin, Cout, H, W, HW,
                      compute_dtype, vmem_limit, budget, max_hw_tile,
                      fsp_mean, fcp_mean)


# ---------------------------------------------------------------------------
# Deterministic parameter init (synthetic; shapes follow the PyTorch module)
# ---------------------------------------------------------------------------

def init_params(key, in_chan, out_chan, reduction=16):
    def nrm(k, shape, scale=0.2):
        return (scale * jax.random.normal(k, shape)).astype(jnp.float32)

    keys = iter(jax.random.split(key, 32))

    def scse_params(C):
        Cm = max(C // reduction, 1)
        return {
            "w1": nrm(next(keys), (C, Cm)),   # Conv2d(C, Cm, 1) weight, (in, out)
            "b1": nrm(next(keys), (1, Cm)),
            "w2": nrm(next(keys), (Cm, C)),   # Conv2d(Cm, C, 1) weight, (in, out)
            "b2": nrm(next(keys), (1, C)),
            "ws": nrm(next(keys), (C, 1)),    # Conv2d(C, 1, 1) weight, (in, out)
            "bs": nrm(next(keys), (1, 1)),
        }

    s1 = scse_params(in_chan)
    s2 = scse_params(in_chan)

    # ConvBNReLU(in_chan*2 -> out_chan, ks=1), bias=False; BN running stats folded.
    w_conv = nrm(next(keys), (2 * in_chan, out_chan), scale=0.1)
    gamma = 1.0 + nrm(next(keys), (1, out_chan), scale=0.1)
    beta = nrm(next(keys), (1, out_chan), scale=0.1)
    run_mean = nrm(next(keys), (1, out_chan), scale=0.1)
    run_var = 1.0 + jnp.abs(nrm(next(keys), (1, out_chan), scale=0.1))
    eps = 1e-5
    bn_scale = gamma / jnp.sqrt(run_var + eps)
    bn_bias = beta - run_mean * bn_scale

    s3 = scse_params(out_chan)

    params = {}
    for name, d in (("s1", s1), ("s2", s2), ("s3", s3)):
        for k, v in d.items():
            params[f"{name}_{k}"] = v
    params["w_conv"] = w_conv
    params["bn_scale"] = bn_scale.astype(jnp.float32)
    params["bn_bias"] = bn_bias.astype(jnp.float32)
    return params


# ---------------------------------------------------------------------------
# Pure-JAX reference (matching precision policy: bf16 operands, f32 accumulation)
# ---------------------------------------------------------------------------

def reference(fsp_nchw, fcp_nchw, params, compute_dtype=jnp.bfloat16):
    N, Cin, H, W = fsp_nchw.shape
    HW = H * W
    Cout = params["w_conv"].shape[1]
    f32 = jnp.float32

    fsp = fsp_nchw.reshape(N, Cin, HW).astype(compute_dtype)
    fcp = fcp_nchw.reshape(N, Cin, HW).astype(compute_dtype)

    def scse_gate(x_bf16, prefix):
        x = x_bf16.astype(f32)
        pooled = jnp.mean(x, axis=2)                                       # (N, C)
        g = _cse_gate_xla(pooled, params[f"{prefix}_w1"], params[f"{prefix}_b1"],
                          params[f"{prefix}_w2"], params[f"{prefix}_b2"])  # (N, C)
        sse = jax.nn.sigmoid(
            jnp.einsum("ncp,cj->njp", x, params[f"{prefix}_ws"].astype(f32))
            + params[f"{prefix}_bs"].astype(f32)[:, :, None])              # (N, 1, HW)
        return g[:, :, None] + sse

    a = fsp * scse_gate(fsp, "s1").astype(compute_dtype)
    b = fcp * scse_gate(fcp, "s2").astype(compute_dtype)
    ab = jnp.concatenate([a, b], axis=1)                                   # (N, 2Cin, HW)

    wcat, bn_bias = _prep_fusion_weights(params, compute_dtype)
    feat = jnp.einsum("oc,ncp->nop", wcat, ab, preferred_element_type=f32)
    feat = jnp.maximum(feat + bn_bias[None], 0.0)                          # (N, Cout, HW) f32

    pooled3 = jnp.mean(feat, axis=2)
    g3 = _cse_gate_xla(pooled3, params["s3_w1"], params["s3_b1"],
                       params["s3_w2"], params["s3_b2"])
    sse3 = jax.nn.sigmoid(
        jnp.einsum("ncp,cj->njp", feat, params["s3_ws"].astype(f32))
        + params["s3_bs"].astype(f32)[:, :, None])
    out = (feat * (g3[:, :, None] + sse3)).astype(compute_dtype)
    return out.reshape(N, Cout, H, W)


# ---------------------------------------------------------------------------

if __name__ == "__main__":
    key = jax.random.PRNGKey(0)
    k_fsp, k_fcp, k_params, k_odd = jax.random.split(key, 4)

    def check(out, ref, tag):
        assert out.shape == ref.shape, (tag, out.shape, ref.shape)
        out32 = out.astype(jnp.float32)
        ref32 = ref.astype(jnp.float32)
        err = float(jnp.max(jnp.abs(out32 - ref32)))
        assert jnp.allclose(out32, ref32, atol=3e-2, rtol=3e-2), (tag, err)
        return err

    # Case 1: fully fused single-pass kernel (small per-batch working set).
    N, IN_CHAN, OUT_CHAN, H, W = 2, 32, 32, 16, 16   # in_chan multiple of reduction=16
    fsp = jax.random.normal(k_fsp, (N, IN_CHAN, H, W), jnp.float32).astype(jnp.bfloat16)
    fcp = jax.random.normal(k_fcp, (N, IN_CHAN, H, W), jnp.float32).astype(jnp.bfloat16)
    params = init_params(k_params, IN_CHAN, OUT_CHAN)

    run_fused = jax.jit(lambda a, b, p: feature_fusion_scse_v2(a, b, p))
    out_fused = jax.block_until_ready(run_fused(fsp, fcp, params))
    ref = reference(fsp, fcp, params)
    check(out_fused, ref, "fused")

    # Case 2: forced two-pass tiled fallback (exercises the resident psum accumulator).
    run_tiled = jax.jit(lambda a, b, p: feature_fusion_scse_v2(
        a, b, p, force_tiled=True, max_hw_tile=128))
    out_tiled = jax.block_until_ready(run_tiled(fsp, fcp, params))
    check(out_tiled, ref, "tiled")

    # Case 3: tiled fallback with a non-128-multiple spatial extent (padding + masked psum).
    H2, W2 = 12, 13
    fsp2 = jax.random.normal(jax.random.fold_in(k_odd, 0),
                             (N, IN_CHAN, H2, W2), jnp.float32).astype(jnp.bfloat16)
    fcp2 = jax.random.normal(jax.random.fold_in(k_odd, 1),
                             (N, IN_CHAN, H2, W2), jnp.float32).astype(jnp.bfloat16)
    out_odd = jax.block_until_ready(run_tiled(fsp2, fcp2, params))
    ref_odd = reference(fsp2, fcp2, params)
    check(out_odd, ref_odd, "tiled-odd")

    print("KERNEL_OK")
</pallas_src>

<mosaic_0001>
module attributes {stable_mosaic.version = 11 : i64} {
  func.func @_fused_kernel(%arg0: i32, %arg1: memref<1x32x256xbf16, #tpu.memory_space<vmem>>, %arg2: memref<1x32x256xbf16, #tpu.memory_space<vmem>>, %arg3: memref<32x2xf32, #tpu.memory_space<vmem>>, %arg4: memref<1x2xf32, #tpu.memory_space<vmem>>, %arg5: memref<32x2xf32, #tpu.memory_space<vmem>>, %arg6: memref<32x1xf32, #tpu.memory_space<vmem>>, %arg7: memref<32x1xf32, #tpu.memory_space<vmem>>, %arg8: memref<32x2xf32, #tpu.memory_space<vmem>>, %arg9: memref<1x2xf32, #tpu.memory_space<vmem>>, %arg10: memref<32x2xf32, #tpu.memory_space<vmem>>, %arg11: memref<32x1xf32, #tpu.memory_space<vmem>>, %arg12: memref<32x1xf32, #tpu.memory_space<vmem>>, %arg13: memref<32x2xf32, #tpu.memory_space<vmem>>, %arg14: memref<1x2xf32, #tpu.memory_space<vmem>>, %arg15: memref<32x2xf32, #tpu.memory_space<vmem>>, %arg16: memref<32x1xf32, #tpu.memory_space<vmem>>, %arg17: memref<32x1xf32, #tpu.memory_space<vmem>>, %arg18: memref<32x64xbf16, #tpu.memory_space<vmem>>, %arg19: memref<32x1xf32, #tpu.memory_space<vmem>>, %arg20: memref<3xf32, #tpu.memory_space<smem>>, %arg21: memref<1x32x256xbf16, #tpu.memory_space<vmem>>, %arg22: memref<64x256xbf16, #tpu.memory_space<vmem>>) attributes {dimension_semantics = [#tpu.dimension_semantics<parallel>], iteration_bounds = array<i64: 2>, scalar_prefetch = 0 : i64, scratch_operands = 1 : i64, tpu.core_type = #tpu.core_type<tc>, window_params = [{transform_indices = @transform_0, window_bounds = array<i64: 1, 32, 256>}, {transform_indices = @transform_1, window_bounds = array<i64: 1, 32, 256>}, {pipeline_mode = #tpu.pipeline_mode<synchronous>, transform_indices = @transform_2, window_bounds = array<i64: 32, 2>}, {pipeline_mode = #tpu.pipeline_mode<synchronous>, transform_indices = @transform_3, window_bounds = array<i64: 1, 2>}, {pipeline_mode = #tpu.pipeline_mode<synchronous>, transform_indices = @transform_4, window_bounds = array<i64: 32, 2>}, {pipeline_mode = #tpu.pipeline_mode<synchronous>, transform_indices = @transform_5, window_bounds = array<i64: 32, 1>}, {pipeline_mode = #tpu.pipeline_mode<synchronous>, transform_indices = @transform_6, window_bounds = array<i64: 32, 1>}, {pipeline_mode = #tpu.pipeline_mode<synchronous>, transform_indices = @transform_7, window_bounds = array<i64: 32, 2>}, {pipeline_mode = #tpu.pipeline_mode<synchronous>, transform_indices = @transform_8, window_bounds = array<i64: 1, 2>}, {pipeline_mode = #tpu.pipeline_mode<synchronous>, transform_indices = @transform_9, window_bounds = array<i64: 32, 2>}, {pipeline_mode = #tpu.pipeline_mode<synchronous>, transform_indices = @transform_10, window_bounds = array<i64: 32, 1>}, {pipeline_mode = #tpu.pipeline_mode<synchronous>, transform_indices = @transform_11, window_bounds = array<i64: 32, 1>}, {pipeline_mode = #tpu.pipeline_mode<synchronous>, transform_indices = @transform_12, window_bounds = array<i64: 32, 2>}, {pipeline_mode = #tpu.pipeline_mode<synchronous>, transform_indices = @transform_13, window_bounds = array<i64: 1, 2>}, {pipeline_mode = #tpu.pipeline_mode<synchronous>, transform_indices = @transform_14, window_bounds = array<i64: 32, 2>}, {pipeline_mode = #tpu.pipeline_mode<synchronous>, transform_indices = @transform_15, window_bounds = array<i64: 32, 1>}, {pipeline_mode = #tpu.pipeline_mode<synchronous>, transform_indices = @transform_16, window_bounds = array<i64: 32, 1>}, {pipeline_mode = #tpu.pipeline_mode<synchronous>, transform_indices = @transform_17, window_bounds = array<i64: 32, 64>}, {pipeline_mode = #tpu.pipeline_mode<synchronous>, transform_indices = @transform_18, window_bounds = array<i64: 32, 1>}, {transform_indices = @transform_19, window_bounds = array<i64: 3>}, {transform_indices = @transform_20, window_bounds = array<i64: 1, 32, 256>}]} {
    %c0 = arith.constant 0 : index
    %c0_0 = arith.constant 0 : index
    %c0_1 = arith.constant 0 : index
    %0 = vector.load %arg1[%c0, %c0_0, %c0_1] : memref<1x32x256xbf16, #tpu.memory_space<vmem>>, vector<1x32x256xbf16>
    %1 = vector.shape_cast %0 : vector<1x32x256xbf16> to vector<32x256xbf16>
    %c0_2 = arith.constant 0 : index
    %c0_3 = arith.constant 0 : index
    %c0_4 = arith.constant 0 : index
    %2 = vector.load %arg2[%c0_2, %c0_3, %c0_4] : memref<1x32x256xbf16, #tpu.memory_space<vmem>>, vector<1x32x256xbf16>
    %3 = vector.shape_cast %2 : vector<1x32x256xbf16> to vector<32x256xbf16>
    %4 = arith.extf %1 : vector<32x256xbf16> to vector<32x256xf32>
    %cst = arith.constant dense<0.000000e+00> : vector<32xf32>
    %5 = vector.multi_reduction <add>, %4, %cst [1] : vector<32x256xf32> to vector<32xf32>
    %6 = vector.shape_cast %5 : vector<32xf32> to vector<32x1xf32>
    %cst_5 = arith.constant 3.906250e-03 : f32
    %7 = vector.broadcast %cst_5 : f32 to vector<32x1xf32>
    %8 = arith.mulf %6, %7 : vector<32x1xf32>
    %c0_6 = arith.constant 0 : index
    %c0_7 = arith.constant 0 : index
    %9 = vector.load %arg3[%c0_6, %c0_7] : memref<32x2xf32, #tpu.memory_space<vmem>>, vector<32x2xf32>
    %10 = vector.broadcast %8 : vector<32x1xf32> to vector<32x2xf32>
    %11 = arith.mulf %10, %9 : vector<32x2xf32>
    %cst_8 = arith.constant dense<0.000000e+00> : vector<2xf32>
    %12 = vector.multi_reduction <add>, %11, %cst_8 [0] : vector<32x2xf32> to vector<2xf32>
    %13 = vector.shape_cast %12 : vector<2xf32> to vector<1x2xf32>
    %c0_9 = arith.constant 0 : index
    %c0_10 = arith.constant 0 : index
    %14 = vector.load %arg4[%c0_9, %c0_10] : memref<1x2xf32, #tpu.memory_space<vmem>>, vector<1x2xf32>
    %15 = arith.addf %13, %14 : vector<1x2xf32>
    %cst_11 = arith.constant 0.000000e+00 : f32
    %16 = vector.broadcast %cst_11 : f32 to vector<1x2xf32>
    %17 = arith.maximumf %15, %16 : vector<1x2xf32>
    %c0_12 = arith.constant 0 : index
    %c0_13 = arith.constant 0 : index
    %18 = vector.load %arg5[%c0_12, %c0_13] : memref<32x2xf32, #tpu.memory_space<vmem>>, vector<32x2xf32>
    %19 = vector.broadcast %17 : vector<1x2xf32> to vector<32x2xf32>
    %20 = arith.mulf %18, %19 : vector<32x2xf32>
    %cst_14 = arith.constant dense<0.000000e+00> : vector<32xf32>
    %21 = vector.multi_reduction <add>, %20, %cst_14 [1] : vector<32x2xf32> to vector<32xf32>
    %22 = vector.shape_cast %21 : vector<32xf32> to vector<32x1xf32>
    %c0_15 = arith.constant 0 : index
    %c0_16 = arith.constant 0 : index
    %23 = vector.load %arg6[%c0_15, %c0_16] : memref<32x1xf32, #tpu.memory_space<vmem>>, vector<32x1xf32>
    %24 = arith.addf %22, %23 : vector<32x1xf32>
    %25 = arith.negf %24 : vector<32x1xf32>
    %26 = math.exp %25 : vector<32x1xf32>
    %cst_17 = arith.constant 1.000000e+00 : f32
    %27 = vector.broadcast %cst_17 : f32 to vector<32x1xf32>
    %28 = arith.addf %27, %26 : vector<32x1xf32>
    %29 = arith.divf %27, %28 : vector<32x1xf32>
    %30 = arith.extf %3 : vector<32x256xbf16> to vector<32x256xf32>
    %cst_18 = arith.constant dense<0.000000e+00> : vector<32xf32>
    %31 = vector.multi_reduction <add>, %30, %cst_18 [1] : vector<32x256xf32> to vector<32xf32>
    %32 = vector.shape_cast %31 : vector<32xf32> to vector<32x1xf32>
    %cst_19 = arith.constant 3.906250e-03 : f32
    %33 = vector.broadcast %cst_19 : f32 to vector<32x1xf32>
    %34 = arith.mulf %32, %33 : vector<32x1xf32>
    %c0_20 = arith.constant 0 : index
    %c0_21 = arith.constant 0 : index
    %35 = vector.load %arg8[%c0_20, %c0_21] : memref<32x2xf32, #tpu.memory_space<vmem>>, vector<32x2xf32>
    %36 = vector.broadcast %34 : vector<32x1xf32> to vector<32x2xf32>
    %37 = arith.mulf %36, %35 : vector<32x2xf32>
    %cst_22 = arith.constant dense<0.000000e+00> : vector<2xf32>
    %38 = vector.multi_reduction <add>, %37, %cst_22 [0] : vector<32x2xf32> to vector<2xf32>
    %39 = vector.shape_cast %38 : vector<2xf32> to vector<1x2xf32>
    %c0_23 = arith.constant 0 : index
    %c0_24 = arith.constant 0 : index
    %40 = vector.load %arg9[%c0_23, %c0_24] : memref<1x2xf32, #tpu.memory_space<vmem>>, vector<1x2xf32>
    %41 = arith.addf %39, %40 : vector<1x2xf32>
    %cst_25 = arith.constant 0.000000e+00 : f32
    %42 = vector.broadcast %cst_25 : f32 to vector<1x2xf32>
    %43 = arith.maximumf %41, %42 : vector<1x2xf32>
    %c0_26 = arith.constant 0 : index
    %c0_27 = arith.constant 0 : index
    %44 = vector.load %arg10[%c0_26, %c0_27] : memref<32x2xf32, #tpu.memory_space<vmem>>, vector<32x2xf32>
    %45 = vector.broadcast %43 : vector<1x2xf32> to vector<32x2xf32>
    %46 = arith.mulf %44, %45 : vector<32x2xf32>
    %cst_28 = arith.constant dense<0.000000e+00> : vector<32xf32>
    %47 = vector.multi_reduction <add>, %46, %cst_28 [1] : vector<32x2xf32> to vector<32xf32>
    %48 = vector.shape_cast %47 : vector<32xf32> to vector<32x1xf32>
    %c0_29 = arith.constant 0 : index
    %c0_30 = arith.constant 0 : index
    %49 = vector.load %arg11[%c0_29, %c0_30] : memref<32x1xf32, #tpu.memory_space<vmem>>, vector<32x1xf32>
    %50 = arith.addf %48, %49 : vector<32x1xf32>
    %51 = arith.negf %50 : vector<32x1xf32>
    %52 = math.exp %51 : vector<32x1xf32>
    %cst_31 = arith.constant 1.000000e+00 : f32
    %53 = vector.broadcast %cst_31 : f32 to vector<32x1xf32>
    %54 = arith.addf %53, %52 : vector<32x1xf32>
    %55 = arith.divf %53, %54 : vector<32x1xf32>
    %c0_32 = arith.constant 0 : index
    %56 = memref.load %arg20[%c0_32] : memref<3xf32, #tpu.memory_space<smem>>
    %57 = arith.extf %1 : vector<32x256xbf16> to vector<32x256xf32>
    %c0_33 = arith.constant 0 : index
    %c0_34 = arith.constant 0 : index
    %58 = vector.load %arg7[%c0_33, %c0_34] : memref<32x1xf32, #tpu.memory_space<vmem>>, vector<32x1xf32>
    %59 = vector.broadcast %58 : vector<32x1xf32> to vector<32x256xf32>
    %60 = arith.mulf %57, %59 : vector<32x256xf32>
    %cst_35 = arith.constant dense<0.000000e+00> : vector<256xf32>
    %61 = vector.multi_reduction <add>, %60, %cst_35 [0] : vector<32x256xf32> to vector<256xf32>
    %62 = vector.shape_cast %61 : vector<256xf32> to vector<1x256xf32>
    %63 = vector.broadcast %56 : f32 to vector<1x256xf32>
    %64 = arith.addf %62, %63 : vector<1x256xf32>
    %65 = arith.negf %64 : vector<1x256xf32>
    %66 = math.exp %65 : vector<1x256xf32>
    %cst_36 = arith.constant 1.000000e+00 : f32
    %67 = vector.broadcast %cst_36 : f32 to vector<1x256xf32>
    %68 = arith.addf %67, %66 : vector<1x256xf32>
    %69 = arith.divf %67, %68 : vector<1x256xf32>
    %c1 = arith.constant 1 : index
    %70 = memref.load %arg20[%c1] : memref<3xf32, #tpu.memory_space<smem>>
    %71 = arith.extf %3 : vector<32x256xbf16> to vector<32x256xf32>
    %c0_37 = arith.constant 0 : index
    %c0_38 = arith.constant 0 : index
    %72 = vector.load %arg12[%c0_37, %c0_38] : memref<32x1xf32, #tpu.memory_space<vmem>>, vector<32x1xf32>
    %73 = vector.broadcast %72 : vector<32x1xf32> to vector<32x256xf32>
    %74 = arith.mulf %71, %73 : vector<32x256xf32>
    %cst_39 = arith.constant dense<0.000000e+00> : vector<256xf32>
    %75 = vector.multi_reduction <add>, %74, %cst_39 [0] : vector<32x256xf32> to vector<256xf32>
    %76 = vector.shape_cast %75 : vector<256xf32> to vector<1x256xf32>
    %77 = vector.broadcast %70 : f32 to vector<1x256xf32>
    %78 = arith.addf %76, %77 : vector<1x256xf32>
    %79 = arith.negf %78 : vector<1x256xf32>
    %80 = math.exp %79 : vector<1x256xf32>
    %cst_40 = arith.constant 1.000000e+00 : f32
    %81 = vector.broadcast %cst_40 : f32 to vector<1x256xf32>
    %82 = arith.addf %81, %80 : vector<1x256xf32>
    %83 = arith.divf %81, %82 : vector<1x256xf32>
    %84 = vector.broadcast %29 : vector<32x1xf32> to vector<32x256xf32>
    %85 = vector.broadcast %69 : vector<1x256xf32> to vector<32x256xf32>
    %86 = arith.addf %84, %85 : vector<32x256xf32>
    %87 = arith.truncf %86 : vector<32x256xf32> to vector<32x256xbf16>
    %88 = arith.mulf %1, %87 : vector<32x256xbf16>
    %c0_41 = arith.constant 0 : index
    %c0_42 = arith.constant 0 : index
    %89 = vector.load %arg22[%c0_41, %c0_42] : memref<64x256xbf16, #tpu.memory_space<vmem>>, vector<32x256xbf16>
    tpu.vector_store %arg22[%c0_41, %c0_42], %88 {strides = array<i32>} : memref<64x256xbf16, #tpu.memory_space<vmem>>, vector<32x256xbf16>,
    %90 = vector.broadcast %55 : vector<32x1xf32> to vector<32x256xf32>
    %91 = vector.broadcast %83 : vector<1x256xf32> to vector<32x256xf32>
    %92 = arith.addf %90, %91 : vector<32x256xf32>
    %93 = arith.truncf %92 : vector<32x256xf32> to vector<32x256xbf16>
    %94 = arith.mulf %3, %93 : vector<32x256xbf16>
    %c32 = arith.constant 32 : index
    %c0_43 = arith.constant 0 : index
    %95 = vector.load %arg22[%c32, %c0_43] : memref<64x256xbf16, #tpu.memory_space<vmem>>, vector<32x256xbf16>
    tpu.vector_store %arg22[%c32, %c0_43], %94 {strides = array<i32>} : memref<64x256xbf16, #tpu.memory_space<vmem>>, vector<32x256xbf16>,
    %c0_44 = arith.constant 0 : index
    %c0_45 = arith.constant 0 : index
    %96 = vector.load %arg18[%c0_44, %c0_45] : memref<32x64xbf16, #tpu.memory_space<vmem>>, vector<32x64xbf16>
    %c0_46 = arith.constant 0 : index
    %c0_47 = arith.constant 0 : index
    %97 = vector.load %arg22[%c0_46, %c0_47] : memref<64x256xbf16, #tpu.memory_space<vmem>>, vector<64x256xbf16>
    %cst_48 = arith.constant dense<0.000000e+00> : vector<32x256xf32>
    %98 = tpu.matmul %96, %97, %cst_48 {dimension_numbers = #tpu.dot_dimension_numbers<[1], [0], [0], [1], [0, 0, 1, 1], [], []>} : vector<32x64xbf16>, vector<64x256xbf16>, vector<32x256xf32> -> vector<32x256xf32>
    %c0_49 = arith.constant 0 : index
    %c0_50 = arith.constant 0 : index
    %99 = vector.load %arg19[%c0_49, %c0_50] : memref<32x1xf32, #tpu.memory_space<vmem>>, vector<32x1xf32>
    %100 = vector.broadcast %99 : vector<32x1xf32> to vector<32x256xf32>
    %101 = arith.addf %98, %100 : vector<32x256xf32>
    %cst_51 = arith.constant 0.000000e+00 : f32
    %102 = vector.broadcast %cst_51 : f32 to vector<32x256xf32>
    %103 = arith.maximumf %101, %102 : vector<32x256xf32>
    %cst_52 = arith.constant dense<0.000000e+00> : vector<32xf32>
    %104 = vector.multi_reduction <add>, %103, %cst_52 [1] : vector<32x256xf32> to vector<32xf32>
    %105 = vector.shape_cast %104 : vector<32xf32> to vector<32x1xf32>
    %cst_53 = arith.constant 3.906250e-03 : f32
    %106 = vector.broadcast %cst_53 : f32 to vector<32x1xf32>
    %107 = arith.mulf %105, %106 : vector<32x1xf32>
    %c0_54 = arith.constant 0 : index
    %c0_55 = arith.constant 0 : index
    %108 = vector.load %arg13[%c0_54, %c0_55] : memref<32x2xf32, #tpu.memory_space<vmem>>, vector<32x2xf32>
    %109 = vector.broadcast %107 : vector<32x1xf32> to vector<32x2xf32>
    %110 = arith.mulf %109, %108 : vector<32x2xf32>
    %cst_56 = arith.constant dense<0.000000e+00> : vector<2xf32>
    %111 = vector.multi_reduction <add>, %110, %cst_56 [0] : vector<32x2xf32> to vector<2xf32>
    %112 = vector.shape_cast %111 : vector<2xf32> to vector<1x2xf32>
    %c0_57 = arith.constant 0 : index
    %c0_58 = arith.constant 0 : index
    %113 = vector.load %arg14[%c0_57, %c0_58] : memref<1x2xf32, #tpu.memory_space<vmem>>, vector<1x2xf32>
    %114 = arith.addf %112, %113 : vector<1x2xf32>
    %cst_59 = arith.constant 0.000000e+00 : f32
    %115 = vector.broadcast %cst_59 : f32 to vector<1x2xf32>
    %116 = arith.maximumf %114, %115 : vector<1x2xf32>
    %c0_60 = arith.constant 0 : index
    %c0_61 = arith.constant 0 : index
    %117 = vector.load %arg15[%c0_60, %c0_61] : memref<32x2xf32, #tpu.memory_space<vmem>>, vector<32x2xf32>
    %118 = vector.broadcast %116 : vector<1x2xf32> to vector<32x2xf32>
    %119 = arith.mulf %117, %118 : vector<32x2xf32>
    %cst_62 = arith.constant dense<0.000000e+00> : vector<32xf32>
    %120 = vector.multi_reduction <add>, %119, %cst_62 [1] : vector<32x2xf32> to vector<32xf32>
    %121 = vector.shape_cast %120 : vector<32xf32> to vector<32x1xf32>
    %c0_63 = arith.constant 0 : index
    %c0_64 = arith.constant 0 : index
    %122 = vector.load %arg16[%c0_63, %c0_64] : memref<32x1xf32, #tpu.memory_space<vmem>>, vector<32x1xf32>
    %123 = arith.addf %121, %122 : vector<32x1xf32>
    %124 = arith.negf %123 : vector<32x1xf32>
    %125 = math.exp %124 : vector<32x1xf32>
    %cst_65 = arith.constant 1.000000e+00 : f32
    %126 = vector.broadcast %cst_65 : f32 to vector<32x1xf32>
    %127 = arith.addf %126, %125 : vector<32x1xf32>
    %128 = arith.divf %126, %127 : vector<32x1xf32>
    %c2 = arith.constant 2 : index
    %129 = memref.load %arg20[%c2] : memref<3xf32, #tpu.memory_space<smem>>
    %c0_66 = arith.constant 0 : index
    %c0_67 = arith.constant 0 : index
    %130 = vector.load %arg17[%c0_66, %c0_67] : memref<32x1xf32, #tpu.memory_space<vmem>>, vector<32x1xf32>
    %131 = vector.broadcast %130 : vector<32x1xf32> to vector<32x256xf32>
    %132 = arith.mulf %103, %131 : vector<32x256xf32>
    %cst_68 = arith.constant dense<0.000000e+00> : vector<256xf32>
    %133 = vector.multi_reduction <add>, %132, %cst_68 [0] : vector<32x256xf32> to vector<256xf32>
    %134 = vector.shape_cast %133 : vector<256xf32> to vector<1x256xf32>
    %135 = vector.broadcast %129 : f32 to vector<1x256xf32>
    %136 = arith.addf %134, %135 : vector<1x256xf32>
    %137 = arith.negf %136 : vector<1x256xf32>
    %138 = math.exp %137 : vector<1x256xf32>
    %cst_69 = arith.constant 1.000000e+00 : f32
    %139 = vector.broadcast %cst_69 : f32 to vector<1x256xf32>
    %140 = arith.addf %139, %138 : vector<1x256xf32>
    %141 = arith.divf %139, %140 : vector<1x256xf32>
    %142 = vector.broadcast %128 : vector<32x1xf32> to vector<32x256xf32>
    %143 = vector.broadcast %141 : vector<1x256xf32> to vector<32x256xf32>
    %144 = arith.addf %142, %143 : vector<32x256xf32>
    %145 = arith.mulf %103, %144 : vector<32x256xf32>
    %146 = arith.truncf %145 : vector<32x256xf32> to vector<32x256xbf16>
    %c0_70 = arith.constant 0 : index
    %c0_71 = arith.constant 0 : index
    %c0_72 = arith.constant 0 : index
    %147 = vector.load %arg21[%c0_70, %c0_71, %c0_72] : memref<1x32x256xbf16, #tpu.memory_space<vmem>>, vector<1x32x256xbf16>
    %148 = vector.shape_cast %147 : vector<1x32x256xbf16> to vector<32x256xbf16>
    %149 = vector.shape_cast %146 : vector<32x256xbf16> to vector<1x32x256xbf16>
    tpu.vector_store %arg21[%c0_70, %c0_71, %c0_72], %149 {strides = array<i32>} : memref<1x32x256xbf16, #tpu.memory_space<vmem>>, vector<1x32x256xbf16>,
    return
  }
  func.func @transform_0(%arg0: i32) -> (i32, i32, i32) {
    %c0_i32 = arith.constant 0 : i32
    %c0_i32_0 = arith.constant 0 : i32
    %c0_i32_1 = arith.constant 0 : i32
    return %arg0, %c0_i32, %c0_i32_0 : i32, i32, i32
  }
  func.func @transform_1(%arg0: i32) -> (i32, i32, i32) {
    %c0_i32 = arith.constant 0 : i32
    %c0_i32_0 = arith.constant 0 : i32
    %c0_i32_1 = arith.constant 0 : i32
    return %arg0, %c0_i32, %c0_i32_0 : i32, i32, i32
  }
  func.func @transform_2(%arg0: i32) -> (i32, i32) {
    %c0_i32 = arith.constant 0 : i32
    %c0_i32_0 = arith.constant 0 : i32
    %c0_i32_1 = arith.constant 0 : i32
    return %c0_i32, %c0_i32_0 : i32, i32
  }
  func.func @transform_3(%arg0: i32) -> (i32, i32) {
    %c0_i32 = arith.constant 0 : i32
    %c0_i32_0 = arith.constant 0 : i32
    %c0_i32_1 = arith.constant 0 : i32
    return %c0_i32, %c0_i32_0 : i32, i32
  }
  func.func @transform_4(%arg0: i32) -> (i32, i32) {
    %c0_i32 = arith.constant 0 : i32
    %c0_i32_0 = arith.constant 0 : i32
    %c0_i32_1 = arith.constant 0 : i32
    return %c0_i32, %c0_i32_0 : i32, i32
  }
  func.func @transform_5(%arg0: i32) -> (i32, i32) {
    %c0_i32 = arith.constant 0 : i32
    %c0_i32_0 = arith.constant 0 : i32
    %c0_i32_1 = arith.constant 0 : i32
    return %c0_i32, %c0_i32_0 : i32, i32
  }
  func.func @transform_6(%arg0: i32) -> (i32, i32) {
    %c0_i32 = arith.constant 0 : i32
    %c0_i32_0 = arith.constant 0 : i32
    %c0_i32_1 = arith.constant 0 : i32
    return %c0_i32, %c0_i32_0 : i32, i32
  }
  func.func @transform_7(%arg0: i32) -> (i32, i32) {
    %c0_i32 = arith.constant 0 : i32
    %c0_i32_0 = arith.constant 0 : i32
    %c0_i32_1 = arith.constant 0 : i32
    return %c0_i32, %c0_i32_0 : i32, i32
  }
  func.func @transform_8(%arg0: i32) -> (i32, i32) {
    %c0_i32 = arith.constant 0 : i32
    %c0_i32_0 = arith.constant 0 : i32
    %c0_i32_1 = arith.constant 0 : i32
    return %c0_i32, %c0_i32_0 : i32, i32
  }
  func.func @transform_9(%arg0: i32) -> (i32, i32) {
    %c0_i32 = arith.constant 0 : i32
    %c0_i32_0 = arith.constant 0 : i32
    %c0_i32_1 = arith.constant 0 : i32
    return %c0_i32, %c0_i32_0 : i32, i32
  }
  func.func @transform_10(%arg0: i32) -> (i32, i32) {
    %c0_i32 = arith.constant 0 : i32
    %c0_i32_0 = arith.constant 0 : i32
    %c0_i32_1 = arith.constant 0 : i32
    return %c0_i32, %c0_i32_0 : i32, i32
  }
  func.func @transform_11(%arg0: i32) -> (i32, i32) {
    %c0_i32 = arith.constant 0 : i32
    %c0_i32_0 = arith.constant 0 : i32
    %c0_i32_1 = arith.constant 0 : i32
    return %c0_i32, %c0_i32_0 : i32, i32
  }
  func.func @transform_12(%arg0: i32) -> (i32, i32) {
    %c0_i32 = arith.constant 0 : i32
    %c0_i32_0 = arith.constant 0 : i32
    %c0_i32_1 = arith.constant 0 : i32
    return %c0_i32, %c0_i32_0 : i32, i32
  }
  func.func @transform_13(%arg0: i32) -> (i32, i32) {
    %c0_i32 = arith.constant 0 : i32
    %c0_i32_0 = arith.constant 0 : i32
    %c0_i32_1 = arith.constant 0 : i32
    return %c0_i32, %c0_i32_0 : i32, i32
  }
  func.func @transform_14(%arg0: i32) -> (i32, i32) {
    %c0_i32 = arith.constant 0 : i32
    %c0_i32_0 = arith.constant 0 : i32
    %c0_i32_1 = arith.constant 0 : i32
    return %c0_i32, %c0_i32_0 : i32, i32
  }
  func.func @transform_15(%arg0: i32) -> (i32, i32) {
    %c0_i32 = arith.constant 0 : i32
    %c0_i32_0 = arith.constant 0 : i32
    %c0_i32_1 = arith.constant 0 : i32
    return %c0_i32, %c0_i32_0 : i32, i32
  }
  func.func @transform_16(%arg0: i32) -> (i32, i32) {
    %c0_i32 = arith.constant 0 : i32
    %c0_i32_0 = arith.constant 0 : i32
    %c0_i32_1 = arith.constant 0 : i32
    return %c0_i32, %c0_i32_0 : i32, i32
  }
  func.func @transform_17(%arg0: i32) -> (i32, i32) {
    %c0_i32 = arith.constant 0 : i32
    %c0_i32_0 = arith.constant 0 : i32
    %c0_i32_1 = arith.constant 0 : i32
    return %c0_i32, %c0_i32_0 : i32, i32
  }
  func.func @transform_18(%arg0: i32) -> (i32, i32) {
    %c0_i32 = arith.constant 0 : i32
    %c0_i32_0 = arith.constant 0 : i32
    %c0_i32_1 = arith.constant 0 : i32
    return %c0_i32, %c0_i32_0 : i32, i32
  }
  func.func @transform_19(%arg0: i32) -> i32 {
    %c0_i32 = arith.constant 0 : i32
    %c0_i32_0 = arith.constant 0 : i32
    return %c0_i32 : i32
  }
  func.func @transform_20(%arg0: i32) -> (i32, i32, i32) {
    %c0_i32 = arith.constant 0 : i32
    %c0_i32_0 = arith.constant 0 : i32
    %c0_i32_1 = arith.constant 0 : i32
    return %arg0, %c0_i32, %c0_i32_0 : i32, i32, i32
  }
}

</mosaic_0001>

<llo_original>
// kernel: _lambda_.1
$region0: #{_lambda_.1}
  #allocation0 [shape = 'u32[]', space=smem, size = 0x4, offset = 0x4, fixed_abs, tag = 'smem constant byte address 0x4 - core index']
  #allocation1 [shape = 'u32[144,128]{1,0:T(1,128)}', space=vmem, size = 0x12000, scoped, tag = 'internal scratch']
  #allocation2 [shape = 'bf16[64,256]{1,0:T(16,128)(2,1)}', space=vmem, size = 0x8000, scoped, tag = 'scratch operand']
  %s0 = inlined_call_operand.vmem [shape: bf16[2,32,256], index: 0, kind: input, shape index: {}]
  %s1 = inlined_call_operand.vmem [shape: bf16[2,32,256], index: 1, kind: input, shape index: {}]
  %s2 = inlined_call_operand.vmem [shape: f32[32,2], index: 2, kind: input, shape index: {}]
  %s3 = inlined_call_operand.vmem [shape: f32[1,2], index: 3, kind: input, shape index: {}]
  %s4 = inlined_call_operand.vmem [shape: f32[32,2], index: 4, kind: input, shape index: {}]
  %s5 = inlined_call_operand.vmem [shape: f32[32,1], index: 5, kind: input, shape index: {}]
  %s6 = inlined_call_operand.vmem [shape: f32[32,1], index: 6, kind: input, shape index: {}]
  %s7 = inlined_call_operand.vmem [shape: f32[32,2], index: 7, kind: input, shape index: {}]
  %s8 = inlined_call_operand.vmem [shape: f32[1,2], index: 8, kind: input, shape index: {}]
  %s9 = inlined_call_operand.vmem [shape: f32[32,2], index: 9, kind: input, shape index: {}]
  %s10 = inlined_call_operand.vmem [shape: f32[32,1], index: 10, kind: input, shape index: {}]
  %s11 = inlined_call_operand.vmem [shape: f32[32,1], index: 11, kind: input, shape index: {}]
  %s12 = inlined_call_operand.vmem [shape: f32[32,2], index: 12, kind: input, shape index: {}]
  %s13 = inlined_call_operand.vmem [shape: f32[1,2], index: 13, kind: input, shape index: {}]
  %s14 = inlined_call_operand.vmem [shape: f32[32,2], index: 14, kind: input, shape index: {}]
  %s15 = inlined_call_operand.vmem [shape: f32[32,1], index: 15, kind: input, shape index: {}]
  %s16 = inlined_call_operand.vmem [shape: f32[32,1], index: 16, kind: input, shape index: {}]
  %s17 = inlined_call_operand.vmem [shape: bf16[32,64], index: 17, kind: input, shape index: {}]
  %s18 = inlined_call_operand.vmem [shape: f32[32,1], index: 18, kind: input, shape index: {}]
  %s19 = inlined_call_operand.vmem [shape: f32[3], index: 19, kind: input, shape index: {}]
  %s20 = inlined_call_operand.vmem [shape: bf16[2,32,256], index: 20, kind: output, shape index: {}]
  %s21 = sld [smem:[#allocation0]]
  $region117: #{_lambda_.1} parent=0
    _
  %s23 = ssub.s32 1, %s21
  %s24 = scalar_select 0, %s23, %s21
  $region1: #{_lambda_.1} parent=0
    #allocation3 [shape = 'u8[512]{0}', space=smem, size = 0x200, scoped, tag = 'input window, operand 19, single buffered']
    #allocation4 [shape = 's32[2]{0}', space=sflag, size = 0x8, scoped, tag = 'scoped memory for _lambda_.1']
    %25 = vsyncpa [#allocation4], 0
    loop: start=0, step=1, limit=4
    $region2: #{_lambda_.1} parent=1 // loop_pre_header
      _
    $region3: #{_lambda_.1} parent=1 // loop_header
      %s27 = sphi 0, %s31
      %p28 = scmp.ge.s32.totalorder %s27, 4
      %s37 = sphi 0, %s39
      %s40 = sphi 0, %s37
      %s41 = sphi 0, %s40
      %s57 = sphi 0, %s41
      %s63 = sphi 0, %s65
      %s66 = sphi 0, %s63
      %s67 = sphi 0, %s66
      %s83 = sphi 0, %s67
      %s87 = sphi 0, %s87
      %s89 = sphi 0, %s87
      %s90 = sphi 0, %s89
      %s104 = sphi 0, %s90
      %s108 = sphi 0, %s108
      %s110 = sphi 0, %s108
      %s111 = sphi 0, %s110
      %s125 = sphi 0, %s111
      %s129 = sphi 0, %s129
      %s131 = sphi 0, %s129
      %s132 = sphi 0, %s131
      %s146 = sphi 0, %s132
      %s150 = sphi 0, %s150
      %s152 = sphi 0, %s150
      %s153 = sphi 0, %s152
      %s167 = sphi 0, %s153
      %s171 = sphi 0, %s171
      %s173 = sphi 0, %s171
      %s174 = sphi 0, %s173
      %s188 = sphi 0, %s174
      %s192 = sphi 0, %s192
      %s194 = sphi 0, %s192
      %s195 = sphi 0, %s194
      %s209 = sphi 0, %s195
      %s213 = sphi 0, %s213
      %s215 = sphi 0, %s213
      %s216 = sphi 0, %s215
      %s230 = sphi 0, %s216
      %s234 = sphi 0, %s234
      %s236 = sphi 0, %s234
      %s237 = sphi 0, %s236
      %s251 = sphi 0, %s237
      %s255 = sphi 0, %s255
      %s257 = sphi 0, %s255
      %s258 = sphi 0, %s257
      %s272 = sphi 0, %s258
      %s276 = sphi 0, %s276
      %s278 = sphi 0, %s276
      %s279 = sphi 0, %s278
      %s293 = sphi 0, %s279
      %s297 = sphi 0, %s297
      %s299 = sphi 0, %s297
      %s300 = sphi 0, %s299
      %s314 = sphi 0, %s300
      %s318 = sphi 0, %s318
      %s320 = sphi 0, %s318
      %s321 = sphi 0, %s320
      %s335 = sphi 0, %s321
      %s339 = sphi 0, %s339
      %s341 = sphi 0, %s339
      %s342 = sphi 0, %s341
      %s356 = sphi 0, %s342
      %s360 = sphi 0, %s360
      %s362 = sphi 0, %s360
      %s363 = sphi 0, %s362
      %s377 = sphi 0, %s363
      %s381 = sphi 0, %s381
      %s383 = sphi 0, %s381
      %s384 = sphi 0, %s383
      %s398 = sphi 0, %s384
      %s402 = sphi 0, %s402
      %s404 = sphi 0, %s402
      %s405 = sphi 0, %s404
      %s419 = sphi 0, %s405
      %s423 = sphi 0, %s423
      %s425 = sphi 0, %s423
      %s426 = sphi 0, %s425
      %s440 = sphi 0, %s426
      %s444 = sphi 0, %s444
      %s446 = sphi 0, %s444
      %s447 = sphi 0, %s446
      %s461 = sphi 0, %s447
      %s467 = sphi 0, %s469
      %s470 = sphi 0, %s467
      %s471 = sphi 0, %s470
      %s487 = sphi 0, %s471
    $region4: #{_lambda_.1} parent=1 // loop_header_branch
      %30 = sbr.rel (%p28) target = $region8
    $region5: #{_lambda_.1} parent=1 // loop_body
      %s32 = ssub.s32 %s27, 1
      %s33 = ssub.s32 %s27, 2
      %s34 = sadd.s32 %s27, 1
      %s35 = ssub.s32 %s27, %s34
      %p36 = scmp.eq.s32.totalorder %s35, 0
      %s38 = sadd.s32 %s37, 1
      %s39 = scalar_select %p36, %s37, %s38
      %p42 = pneg %p36
      %p43 = scmp.eq.s32.totalorder %s27, 1
      %p44 = por %p42, %p43
      %p45 = scmp.ne.s32.totalorder %s37, %s40
      %p46 = scmp.eq.s32.totalorder %s27, 0
      %p47 = por %p45, %p46
      %p48 = scmp.ne.s32.totalorder %s37, %s40
      %p49 = scmp.eq.s32.totalorder %s32, 1
      %p50 = por %p48, %p49
      %p51 = scmp.ne.s32.totalorder %s40, %s41
      %p52 = scmp.eq.s32.totalorder %s32, 0
      %p53 = por %p51, %p52
      %p54 = scmp.ne.s32.totalorder %s40, %s41
      %p55 = scmp.eq.s32.totalorder %s33, 1
      %p56 = por %p54, %p55
      %p58 = scmp.ne.s32.totalorder %s41, %s57
      %p59 = scmp.eq.s32.totalorder %s33, 0
      %p60 = por %p58, %p59
      %s61 = ssub.s32 %s27, %s34
      %p62 = scmp.eq.s32.totalorder %s61, 0
      %s64 = sadd.s32 %s63, 1
      %s65 = scalar_select %p62, %s63, %s64
      %p68 = pneg %p62
      %p69 = scmp.eq.s32.totalorder %s27, 1
      %p70 = por %p68, %p69
      %p71 = scmp.ne.s32.totalorder %s63, %s66
      %p72 = scmp.eq.s32.totalorder %s27, 0
      %p73 = por %p71, %p72
      %p74 = scmp.ne.s32.totalorder %s63, %s66
      %p75 = scmp.eq.s32.totalorder %s32, 1
      %p76 = por %p74, %p75
      %p77 = scmp.ne.s32.totalorder %s66, %s67
      %p78 = scmp.eq.s32.totalorder %s32, 0
      %p79 = por %p77, %p78
      %p80 = scmp.ne.s32.totalorder %s66, %s67
      %p81 = scmp.eq.s32.totalorder %s33, 1
      %p82 = por %p80, %p81
      %p84 = scmp.ne.s32.totalorder %s67, %s83
      %p85 = scmp.eq.s32.totalorder %s33, 0
      %p86 = por %p84, %p85
      %s88 = sadd.s32 %s87, 1
      %p91 = scmp.eq.s32.totalorder %s27, 1
      %p92 = scmp.ne.s32.totalorder %s87, %s89
      %p93 = scmp.eq.s32.totalorder %s27, 0
      %p94 = por %p92, %p93
      %p95 = scmp.ne.s32.totalorder %s87, %s89
      %p96 = scmp.eq.s32.totalorder %s32, 1
      %p97 = por %p95, %p96
      %p98 = scmp.ne.s32.totalorder %s89, %s90
      %p99 = scmp.eq.s32.totalorder %s32, 0
      %p100 = por %p98, %p99
      %p101 = scmp.ne.s32.totalorder %s89, %s90
      %p102 = scmp.eq.s32.totalorder %s33, 1
      %p103 = por %p101, %p102
      %p105 = scmp.ne.s32.totalorder %s90, %s104
      %p106 = scmp.eq.s32.totalorder %s33, 0
      %p107 = por %p105, %p106
      %s109 = sadd.s32 %s108, 1
      %p112 = scmp.eq.s32.totalorder %s27, 1
      %p113 = scmp.ne.s32.totalorder %s108, %s110
      %p114 = scmp.eq.s32.totalorder %s27, 0
      %p115 = por %p113, %p114
      %p116 = scmp.ne.s32.totalorder %s108, %s110
      %p117 = scmp.eq.s32.totalorder %s32, 1
      %p118 = por %p116, %p117
      %p119 = scmp.ne.s32.totalorder %s110, %s111
      %p120 = scmp.eq.s32.totalorder %s32, 0
      %p121 = por %p119, %p120
      %p122 = scmp.ne.s32.totalorder %s110, %s111
      %p123 = scmp.eq.s32.totalorder %s33, 1
      %p124 = por %p122, %p123
      %p126 = scmp.ne.s32.totalorder %s111, %s125
      %p127 = scmp.eq.s32.totalorder %s33, 0
      %p128 = por %p126, %p127
      %s130 = sadd.s32 %s129, 1
      %p133 = scmp.eq.s32.totalorder %s27, 1
      %p134 = scmp.ne.s32.totalorder %s129, %s131
      %p135 = scmp.eq.s32.totalorder %s27, 0
      %p136 = por %p134, %p135
      %p137 = scmp.ne.s32.totalorder %s129, %s131
      %p138 = scmp.eq.s32.totalorder %s32, 1
      %p139 = por %p137, %p138
      %p140 = scmp.ne.s32.totalorder %s131, %s132
      %p141 = scmp.eq.s32.totalorder %s32, 0
      %p142 = por %p140, %p141
      %p143 = scmp.ne.s32.totalorder %s131, %s132
      %p144 = scmp.eq.s32.totalorder %s33, 1
      %p145 = por %p143, %p144
      %p147 = scmp.ne.s32.totalorder %s132, %s146
      %p148 = scmp.eq.s32.totalorder %s33, 0
      %p149 = por %p147, %p148
      %s151 = sadd.s32 %s150, 1
      %p154 = scmp.eq.s32.totalorder %s27, 1
      %p155 = scmp.ne.s32.totalorder %s150, %s152
      %p156 = scmp.eq.s32.totalorder %s27, 0
      %p157 = por %p155, %p156
      %p158 = scmp.ne.s32.totalorder %s150, %s152
      %p159 = scmp.eq.s32.totalorder %s32, 1
      %p160 = por %p158, %p159
      %p161 = scmp.ne.s32.totalorder %s152, %s153
      %p162 = scmp.eq.s32.totalorder %s32, 0
      %p163 = por %p161, %p162
      %p164 = scmp.ne.s32.totalorder %s152, %s153
      %p165 = scmp.eq.s32.totalorder %s33, 1
      %p166 = por %p164, %p165
      %p168 = scmp.ne.s32.totalorder %s153, %s167
      %p169 = scmp.eq.s32.totalorder %s33, 0
      %p170 = por %p168, %p169
      %s172 = sadd.s32 %s171, 1
      %p175 = scmp.eq.s32.totalorder %s27, 1
      %p176 = scmp.ne.s32.totalorder %s171, %s173
      %p177 = scmp.eq.s32.totalorder %s27, 0
      %p178 = por %p176, %p177
      %p179 = scmp.ne.s32.totalorder %s171, %s173
      %p180 = scmp.eq.s32.totalorder %s32, 1
      %p181 = por %p179, %p180
      %p182 = scmp.ne.s32.totalorder %s173, %s174
      %p183 = scmp.eq.s32.totalorder %s32, 0
      %p184 = por %p182, %p183
      %p185 = scmp.ne.s32.totalorder %s173, %s174
      %p186 = scmp.eq.s32.totalorder %s33, 1
      %p187 = por %p185, %p186
      %p189 = scmp.ne.s32.totalorder %s174, %s188
      %p190 = scmp.eq.s32.totalorder %s33, 0
      %p191 = por %p189, %p190
      %s193 = sadd.s32 %s192, 1
      %p196 = scmp.eq.s32.totalorder %s27, 1
      %p197 = scmp.ne.s32.totalorder %s192, %s194
      %p198 = scmp.eq.s32.totalorder %s27, 0
      %p199 = por %p197, %p198
      %p200 = scmp.ne.s32.totalorder %s192, %s194
      %p201 = scmp.eq.s32.totalorder %s32, 1
      %p202 = por %p200, %p201
      %p203 = scmp.ne.s32.totalorder %s194, %s195
      %p204 = scmp.eq.s32.totalorder %s32, 0
      %p205 = por %p203, %p204
      %p206 = scmp.ne.s32.totalorder %s194, %s195
      %p207 = scmp.eq.s32.totalorder %s33, 1
      %p208 = por %p206, %p207
      %p210 = scmp.ne.s32.totalorder %s195, %s209
      %p211 = scmp.eq.s32.totalorder %s33, 0
      %p212 = por %p210, %p211
      %s214 = sadd.s32 %s213, 1
      %p217 = scmp.eq.s32.totalorder %s27, 1
      %p218 = scmp.ne.s32.totalorder %s213, %s215
      %p219 = scmp.eq.s32.totalorder %s27, 0
      %p220 = por %p218, %p219
      %p221 = scmp.ne.s32.totalorder %s213, %s215
      %p222 = scmp.eq.s32.totalorder %s32, 1
      %p223 = por %p221, %p222
      %p224 = scmp.ne.s32.totalorder %s215, %s216
      %p225 = scmp.eq.s32.totalorder %s32, 0
      %p226 = por %p224, %p225
      %p227 = scmp.ne.s32.totalorder %s215, %s216
      %p228 = scmp.eq.s32.totalorder %s33, 1
      %p229 = por %p227, %p228
      %p231 = scmp.ne.s32.totalorder %s216, %s230
      %p232 = scmp.eq.s32.totalorder %s33, 0
      %p233 = por %p231, %p232
      %s235 = sadd.s32 %s234, 1
      %p238 = scmp.eq.s32.totalorder %s27, 1
      %p239 = scmp.ne.s32.totalorder %s234, %s236
      %p240 = scmp.eq.s32.totalorder %s27, 0
      %p241 = por %p239, %p240
      %p242 = scmp.ne.s32.totalorder %s234, %s236
      %p243 = scmp.eq.s32.totalorder %s32, 1
      %p244 = por %p242, %p243
      %p245 = scmp.ne.s32.totalorder %s236, %s237
      %p246 = scmp.eq.s32.totalorder %s32, 0
      %p247 = por %p245, %p246
      %p248 = scmp.ne.s32.totalorder %s236, %s237
      %p249 = scmp.eq.s32.totalorder %s33, 1
      %p250 = por %p248, %p249
      %p252 = scmp.ne.s32.totalorder %s237, %s251
      %p253 = scmp.eq.s32.totalorder %s33, 0
      %p254 = por %p252, %p253
      %s256 = sadd.s32 %s255, 1
      %p259 = scmp.eq.s32.totalorder %s27, 1
      %p260 = scmp.ne.s32.totalorder %s255, %s257
      %p261 = scmp.eq.s32.totalorder %s27, 0
      %p262 = por %p260, %p261
      %p263 = scmp.ne.s32.totalorder %s255, %s257
      %p264 = scmp.eq.s32.totalorder %s32, 1
      %p265 = por %p263, %p264
      %p266 = scmp.ne.s32.totalorder %s257, %s258
      %p267 = scmp.eq.s32.totalorder %s32, 0
      %p268 = por %p266, %p267
      %p269 = scmp.ne.s32.totalorder %s257, %s258
      %p270 = scmp.eq.s32.totalorder %s33, 1
      %p271 = por %p269, %p270
      %p273 = scmp.ne.s32.totalorder %s258, %s272
      %p274 = scmp.eq.s32.totalorder %s33, 0
      %p275 = por %p273, %p274
      %s277 = sadd.s32 %s276, 1
      %p280 = scmp.eq.s32.totalorder %s27, 1
      %p281 = scmp.ne.s32.totalorder %s276, %s278
      %p282 = scmp.eq.s32.totalorder %s27, 0
      %p283 = por %p281, %p282
      %p284 = scmp.ne.s32.totalorder %s276, %s278
      %p285 = scmp.eq.s32.totalorder %s32, 1
      %p286 = por %p284, %p285
      %p287 = scmp.ne.s32.totalorder %s278, %s279
      %p288 = scmp.eq.s32.totalorder %s32, 0
      %p289 = por %p287, %p288
      %p290 = scmp.ne.s32.totalorder %s278, %s279
      %p291 = scmp.eq.s32.totalorder %s33, 1
      %p292 = por %p290, %p291
      %p294 = scmp.ne.s32.totalorder %s279, %s293
      %p295 = scmp.eq.s32.totalorder %s33, 0
      %p296 = por %p294, %p295
      %s298 = sadd.s32 %s297, 1
      %p301 = scmp.eq.s32.totalorder %s27, 1
      %p302 = scmp.ne.s32.totalorder %s297, %s299
      %p303 = scmp.eq.s32.totalorder %s27, 0
      %p304 = por %p302, %p303
      %p305 = scmp.ne.s32.totalorder %s297, %s299
      %p306 = scmp.eq.s32.totalorder %s32, 1
      %p307 = por %p305, %p306
      %p308 = scmp.ne.s32.totalorder %s299, %s300
      %p309 = scmp.eq.s32.totalorder %s32, 0
      %p310 = por %p308, %p309
      %p311 = scmp.ne.s32.totalorder %s299, %s300
      %p312 = scmp.eq.s32.totalorder %s33, 1
      %p313 = por %p311, %p312
      %p315 = scmp.ne.s32.totalorder %s300, %s314
      %p316 = scmp.eq.s32.totalorder %s33, 0
      %p317 = por %p315, %p316
      %s319 = sadd.s32 %s318, 1
      %p322 = scmp.eq.s32.totalorder %s27, 1
      %p323 = scmp.ne.s32.totalorder %s318, %s320
      %p324 = scmp.eq.s32.totalorder %s27, 0
      %p325 = por %p323, %p324
      %p326 = scmp.ne.s32.totalorder %s318, %s320
      %p327 = scmp.eq.s32.totalorder %s32, 1
      %p328 = por %p326, %p327
      %p329 = scmp.ne.s32.totalorder %s320, %s321
      %p330 = scmp.eq.s32.totalorder %s32, 0
      %p331 = por %p329, %p330
      %p332 = scmp.ne.s32.totalorder %s320, %s321
      %p333 = scmp.eq.s32.totalorder %s33, 1
      %p334 = por %p332, %p333
      %p336 = scmp.ne.s32.totalorder %s321, %s335
      %p337 = scmp.eq.s32.totalorder %s33, 0
      %p338 = por %p336, %p337
      %s340 = sadd.s32 %s339, 1
      %p343 = scmp.eq.s32.totalorder %s27, 1
      %p344 = scmp.ne.s32.totalorder %s339, %s341
      %p345 = scmp.eq.s32.totalorder %s27, 0
      %p346 = por %p344, %p345
      %p347 = scmp.ne.s32.totalorder %s339, %s341
      %p348 = scmp.eq.s32.totalorder %s32, 1
      %p349 = por %p347, %p348
      %p350 = scmp.ne.s32.totalorder %s341, %s342
      %p351 = scmp.eq.s32.totalorder %s32, 0
      %p352 = por %p350, %p351
      %p353 = scmp.ne.s32.totalorder %s341, %s342
      %p354 = scmp.eq.s32.totalorder %s33, 1
      %p355 = por %p353, %p354
      %p357 = scmp.ne.s32.totalorder %s342, %s356
      %p358 = scmp.eq.s32.totalorder %s33, 0
      %p359 = por %p357, %p358
      %s361 = sadd.s32 %s360, 1
      %p364 = scmp.eq.s32.totalorder %s27, 1
      %p365 = scmp.ne.s32.totalorder %s360, %s362
      %p366 = scmp.eq.s32.totalorder %s27, 0
      %p367 = por %p365, %p366
      %p368 = scmp.ne.s32.totalorder %s360, %s362
      %p369 = scmp.eq.s32.totalorder %s32, 1
      %p370 = por %p368, %p369
      %p371 = scmp.ne.s32.totalorder %s362, %s363
      %p372 = scmp.eq.s32.totalorder %s32, 0
      %p373 = por %p371, %p372
      %p374 = scmp.ne.s32.totalorder %s362, %s363
      %p375 = scmp.eq.s32.totalorder %s33, 1
      %p376 = por %p374, %p375
      %p378 = scmp.ne.s32.totalorder %s363, %s377
      %p379 = scmp.eq.s32.totalorder %s33, 0
      %p380 = por %p378, %p379
      %s382 = sadd.s32 %s381, 1
      %p385 = scmp.eq.s32.totalorder %s27, 1
      %p386 = scmp.ne.s32.totalorder %s381, %s383
      %p387 = scmp.eq.s32.totalorder %s27, 0
      %p388 = por %p386, %p387
      %p389 = scmp.ne.s32.totalorder %s381, %s383
      %p390 = scmp.eq.s32.totalorder %s32, 1
      %p391 = por %p389, %p390
      %p392 = scmp.ne.s32.totalorder %s383, %s384
      %p393 = scmp.eq.s32.totalorder %s32, 0
      %p394 = por %p392, %p393
      %p395 = scmp.ne.s32.totalorder %s383, %s384
      %p396 = scmp.eq.s32.totalorder %s33, 1
      %p397 = por %p395, %p396
      %p399 = scmp.ne.s32.totalorder %s384, %s398
      %p400 = scmp.eq.s32.totalorder %s33, 0
      %p401 = por %p399, %p400
      %s403 = sadd.s32 %s402, 1
      %p406 = scmp.eq.s32.totalorder %s27, 1
      %p407 = scmp.ne.s32.totalorder %s402, %s404
      %p408 = scmp.eq.s32.totalorder %s27, 0
      %p409 = por %p407, %p408
      %p410 = scmp.ne.s32.totalorder %s402, %s404
      %p411 = scmp.eq.s32.totalorder %s32, 1
      %p412 = por %p410, %p411
      %p413 = scmp.ne.s32.totalorder %s404, %s405
      %p414 = scmp.eq.s32.totalorder %s32, 0
      %p415 = por %p413, %p414
      %p416 = scmp.ne.s32.totalorder %s404, %s405
      %p417 = scmp.eq.s32.totalorder %s33, 1
      %p418 = por %p416, %p417
      %p420 = scmp.ne.s32.totalorder %s405, %s419
      %p421 = scmp.eq.s32.totalorder %s33, 0
      %p422 = por %p420, %p421
      %s424 = sadd.s32 %s423, 1
      %p427 = scmp.eq.s32.totalorder %s27, 1
      %p428 = scmp.ne.s32.totalorder %s423, %s425
      %p429 = scmp.eq.s32.totalorder %s27, 0
      %p430 = por %p428, %p429
      %p431 = scmp.ne.s32.totalorder %s423, %s425
      %p432 = scmp.eq.s32.totalorder %s32, 1
      %p433 = por %p431, %p432
      %p434 = scmp.ne.s32.totalorder %s425, %s426
      %p435 = scmp.eq.s32.totalorder %s32, 0
      %p436 = por %p434, %p435
      %p437 = scmp.ne.s32.totalorder %s425, %s426
      %p438 = scmp.eq.s32.totalorder %s33, 1
      %p439 = por %p437, %p438
      %p441 = scmp.ne.s32.totalorder %s426, %s440
      %p442 = scmp.eq.s32.totalorder %s33, 0
      %p443 = por %p441, %p442
      %s445 = sadd.s32 %s444, 1
      %p448 = scmp.eq.s32.totalorder %s27, 1
      %p449 = scmp.ne.s32.totalorder %s444, %s446
      %p450 = scmp.eq.s32.totalorder %s27, 0
      %p451 = por %p449, %p450
      %p452 = scmp.ne.s32.totalorder %s444, %s446
      %p453 = scmp.eq.s32.totalorder %s32, 1
      %p454 = por %p452, %p453
      %p455 = scmp.ne.s32.totalorder %s446, %s447
      %p456 = scmp.eq.s32.totalorder %s32, 0
      %p457 = por %p455, %p456
      %p458 = scmp.ne.s32.totalorder %s446, %s447
      %p459 = scmp.eq.s32.totalorder %s33, 1
      %p460 = por %p458, %p459
      %p462 = scmp.ne.s32.totalorder %s447, %s461
      %p463 = scmp.eq.s32.totalorder %s33, 0
      %p464 = por %p462, %p463
      %s465 = ssub.s32 %s27, %s34
      %p466 = scmp.eq.s32.totalorder %s465, 0
      %s468 = sadd.s32 %s467, 1
      %s469 = scalar_select %p466, %s467, %s468
      %p472 = pneg %p466
      %p473 = scmp.eq.s32.totalorder %s27, 1
      %p474 = por %p472, %p473
      %p475 = scmp.ne.s32.totalorder %s467, %s470
      %p476 = scmp.eq.s32.totalorder %s27, 0
      %p477 = por %p475, %p476
      %p478 = scmp.ne.s32.totalorder %s467, %s470
      %p479 = scmp.eq.s32.totalorder %s32, 1
      %p480 = por %p478, %p479
      %p481 = scmp.ne.s32.totalorder %s470, %s471
      %p482 = scmp.eq.s32.totalorder %s32, 0
      %p483 = por %p481, %p482
      %p484 = scmp.ne.s32.totalorder %s470, %s471
      %p485 = scmp.eq.s32.totalorder %s33, 1
      %p486 = por %p484, %p485
      %p488 = scmp.ne.s32.totalorder %s471, %s487
      %p489 = scmp.eq.s32.totalorder %s33, 0
      %p490 = por %p488, %p489
      %p491 = scmp.le.s32.totalorder 1, %s27
      %p492 = scmp.lt.s32.totalorder %s27, 3
      %p493 = pnand %p491, %p492
      %p494 = pneg %p493
      // Predicated region
      $region9: #{_lambda_.1} parent=5 // pred_check
        _
      $region10: #{_lambda_.1} parent=5 // pred_check_branch
        %496 = sbr.rel (%p493) target = $region12
      $region11: #{_lambda_.1} parent=5 // pred_region
        %s497 = ssub.s32 %s27, 1
        // Predicated region
        $region13: #{_lambda_.1} parent=11 // pred_check
          %p498 = pneg %p100
        $region14: #{_lambda_.1} parent=11 // pred_check_branch
          %500 = sbr.rel (%p498) target = $region16
        $region15: #{_lambda_.1} parent=11 // pred_region
          _
        $region16: #{_lambda_.1} parent=11 // pred_fallthru
          _
        // Predicated region
        $region17: #{_lambda_.1} parent=11 // pred_check
          %p501 = pneg %p121
        $region18: #{_lambda_.1} parent=11 // pred_check_branch
          %503 = sbr.rel (%p501) target = $region20
        $region19: #{_lambda_.1} parent=11 // pred_region
          _
        $region20: #{_lambda_.1} parent=11 // pred_fallthru
          _
        // Predicated region
        $region21: #{_lambda_.1} parent=11 // pred_check
          %p504 = pneg %p142
        $region22: #{_lambda_.1} parent=11 // pred_check_branch
          %506 = sbr.rel (%p504) target = $region24
        $region23: #{_lambda_.1} parent=11 // pred_region
          _
        $region24: #{_lambda_.1} parent=11 // pred_fallthru
          _
        // Predicated region
        $region25: #{_lambda_.1} parent=11 // pred_check
          %p507 = pneg %p163
        $region26: #{_lambda_.1} parent=11 // pred_check_branch
          %509 = sbr.rel (%p507) target = $region28
        $region27: #{_lambda_.1} parent=11 // pred_region
          _
        $region28: #{_lambda_.1} parent=11 // pred_fallthru
          _
        // Predicated region
        $region29: #{_lambda_.1} parent=11 // pred_check
          %p510 = pneg %p184
        $region30: #{_lambda_.1} parent=11 // pred_check_branch
          %512 = sbr.rel (%p510) target = $region32
        $region31: #{_lambda_.1} parent=11 // pred_region
          _
        $region32: #{_lambda_.1} parent=11 // pred_fallthru
          _
        // Predicated region
        $region33: #{_lambda_.1} parent=11 // pred_check
          %p513 = pneg %p205
        $region34: #{_lambda_.1} parent=11 // pred_check_branch
          %515 = sbr.rel (%p513) target = $region36
        $region35: #{_lambda_.1} parent=11 // pred_region
          _
        $region36: #{_lambda_.1} parent=11 // pred_fallthru
          _
        // Predicated region
        $region37: #{_lambda_.1} parent=11 // pred_check
          %p516 = pneg %p226
        $region38: #{_lambda_.1} parent=11 // pred_check_branch
          %518 = sbr.rel (%p516) target = $region40
        $region39: #{_lambda_.1} parent=11 // pred_region
          _
        $region40: #{_lambda_.1} parent=11 // pred_fallthru
          _
        // Predicated region
        $region41: #{_lambda_.1} parent=11 // pred_check
          %p519 = pneg %p247
        $region42: #{_lambda_.1} parent=11 // pred_check_branch
          %521 = sbr.rel (%p519) target = $region44
        $region43: #{_lambda_.1} parent=11 // pred_region
          _
        $region44: #{_lambda_.1} parent=11 // pred_fallthru
          _
        // Predicated region
        $region45: #{_lambda_.1} parent=11 // pred_check
          %p522 = pneg %p268
        $region46: #{_lambda_.1} parent=11 // pred_check_branch
          %524 = sbr.rel (%p522) target = $region48
        $region47: #{_lambda_.1} parent=11 // pred_region
          _
        $region48: #{_lambda_.1} parent=11 // pred_fallthru
          _
        // Predicated region
        $region49: #{_lambda_.1} parent=11 // pred_check
          %p525 = pneg %p289
        $region50: #{_lambda_.1} parent=11 // pred_check_branch
          %527 = sbr.rel (%p525) target = $region52
        $region51: #{_lambda_.1} parent=11 // pred_region
          _
        $region52: #{_lambda_.1} parent=11 // pred_fallthru
          _
        // Predicated region
        $region53: #{_lambda_.1} parent=11 // pred_check
          %p528 = pneg %p310
        $region54: #{_lambda_.1} parent=11 // pred_check_branch
          %530 = sbr.rel (%p528) target = $region56
        $region55: #{_lambda_.1} parent=11 // pred_region
          _
        $region56: #{_lambda_.1} parent=11 // pred_fallthru
          _
        // Predicated region
        $region57: #{_lambda_.1} parent=11 // pred_check
          %p531 = pneg %p331
        $region58: #{_lambda_.1} parent=11 // pred_check_branch
          %533 = sbr.rel (%p531) target = $region60
        $region59: #{_lambda_.1} parent=11 // pred_region
          _
        $region60: #{_lambda_.1} parent=11 // pred_fallthru
          _
        // Predicated region
        $region61: #{_lambda_.1} parent=11 // pred_check
          %p534 = pneg %p352
        $region62: #{_lambda_.1} parent=11 // pred_check_branch
          %536 = sbr.rel (%p534) target = $region64
        $region63: #{_lambda_.1} parent=11 // pred_region
          _
        $region64: #{_lambda_.1} parent=11 // pred_fallthru
          _
        // Predicated region
        $region65: #{_lambda_.1} parent=11 // pred_check
          %p537 = pneg %p373
        $region66: #{_lambda_.1} parent=11 // pred_check_branch
          %539 = sbr.rel (%p537) target = $region68
        $region67: #{_lambda_.1} parent=11 // pred_region
          _
        $region68: #{_lambda_.1} parent=11 // pred_fallthru
          _
        // Predicated region
        $region69: #{_lambda_.1} parent=11 // pred_check
          %p540 = pneg %p394
        $region70: #{_lambda_.1} parent=11 // pred_check_branch
          %542 = sbr.rel (%p540) target = $region72
        $region71: #{_lambda_.1} parent=11 // pred_region
          _
        $region72: #{_lambda_.1} parent=11 // pred_fallthru
          _
        // Predicated region
        $region73: #{_lambda_.1} parent=11 // pred_check
          %p543 = pneg %p415
        $region74: #{_lambda_.1} parent=11 // pred_check_branch
          %545 = sbr.rel (%p543) target = $region76
        $region75: #{_lambda_.1} parent=11 // pred_region
          _
        $region76: #{_lambda_.1} parent=11 // pred_fallthru
          _
        // Predicated region
        $region77: #{_lambda_.1} parent=11 // pred_check
          %p546 = pneg %p436
        $region78: #{_lambda_.1} parent=11 // pred_check_branch
          %548 = sbr.rel (%p546) target = $region80
        $region79: #{_lambda_.1} parent=11 // pred_region
          _
        $region80: #{_lambda_.1} parent=11 // pred_fallthru
          _
        // Predicated region
        $region81: #{_lambda_.1} parent=11 // pred_check
          %p549 = pneg %p457
        $region82: #{_lambda_.1} parent=11 // pred_check_branch
          %551 = sbr.rel (%p549) target = $region84
        $region83: #{_lambda_.1} parent=11 // pred_region
          %s553 = ssub.s32 16, 16
          %554 = vsyncadd [#allocation4], %s553
          %s556 = sshll.u32 %s19, 4
          %s557 = int_to_ptr.vmem [resolvable:$true] %s556
          %559 = dma.vmem_to_smem %s557, 16, [#allocation3], [#allocation4]
        $region84: #{_lambda_.1} parent=11 // pred_fallthru
          _
      $region12: #{_lambda_.1} parent=5 // pred_fallthru
        _
      %p560 = scmp.lt.s32.totalorder %s27, 2
      // Predicated region
      $region85: #{_lambda_.1} parent=5 // pred_check
        %p561 = pneg %p560
      $region86: #{_lambda_.1} parent=5 // pred_check_branch
        %563 = sbr.rel (%p561) target = $region88
      $region87: #{_lambda_.1} parent=5 // pred_region
        // Predicated region
        $region89: #{_lambda_.1} parent=87 // pred_check
          %p564 = pneg %p47
        $region90: #{_lambda_.1} parent=87 // pred_check_branch
          %566 = sbr.rel (%p564) target = $region92
        $region91: #{_lambda_.1} parent=87 // pred_region
          %p567 = scmp.lt.s32.totalorder %s27, 1
          %s568 = scalar_select %p567, %s27, 1
          %s569 = smul.addr %s568, 8
          %s570 = smul.addr %s569, 4
          %s571 = scalar_lea.vmem %s0, %s570
        $region92: #{_lambda_.1} parent=87 // pred_fallthru
          _
        // Predicated region
        $region93: #{_lambda_.1} parent=87 // pred_check
          %p572 = pneg %p73
        $region94: #{_lambda_.1} parent=87 // pred_check_branch
          %574 = sbr.rel (%p572) target = $region96
        $region95: #{_lambda_.1} parent=87 // pred_region
          %p575 = scmp.lt.s32.totalorder %s27, 1
          %s576 = scalar_select %p575, %s27, 1
          %s577 = smul.addr %s576, 8
          %s578 = smul.addr %s577, 4
          %s579 = scalar_lea.vmem %s1, %s578
        $region96: #{_lambda_.1} parent=87 // pred_fallthru
          _
      $region88: #{_lambda_.1} parent=5 // pred_fallthru
        _
      %p580 = scmp.le.s32.totalorder 1, %s27
      %p581 = scmp.lt.s32.totalorder %s27, 3
      %p582 = pnand %p580, %p581
      %p583 = pneg %p582
      // Predicated region
      $region97: #{_lambda_.1} parent=5 // pred_check
        _
      $region98: #{_lambda_.1} parent=5 // pred_check_branch
        %585 = sbr.rel (%p582) target = $region100
      $region99: #{_lambda_.1} parent=5 // pred_region
        %s586 = ssub.s32 %s27, 1
        // Predicated region
        $region101: #{_lambda_.1} parent=99 // pred_check
          %p587 = pneg %p457
        $region102: #{_lambda_.1} parent=99 // pred_check_branch
          %589 = sbr.rel (%p587) target = $region104
        $region103: #{_lambda_.1} parent=99 // pred_region
          %590 = dma.done [#allocation4], 16
        $region104: #{_lambda_.1} parent=99 // pred_fallthru
          _
        %591 = sfence
        %p592 = scmp.lt.s32.totalorder %s32, 1
        %s593 = scalar_select %p592, %s32, 1
        %s594 = smul.addr %s593, 8
        %s595 = smul.addr %s594, 4
        %s596 = scalar_lea.vmem %s0, %s595
        %p597 = pneg %p53
        %p598 = pneg %p50
        %p599 = scmp.lt.s32.totalorder %s32, 1
        %s600 = scalar_select %p599, %s32, 1
        %s601 = smul.addr %s600, 8
        %s602 = smul.addr %s601, 4
        %s603 = scalar_lea.vmem %s1, %s602
        %p604 = pneg %p79
        %p605 = pneg %p76
        %p606 = pneg %p100
        %p607 = pneg %p97
        %p608 = pneg %p121
        %p609 = pneg %p118
        %p610 = pneg %p142
        %p611 = pneg %p139
        %p612 = pneg %p163
        %p613 = pneg %p160
        %p614 = pneg %p184
        %p615 = pneg %p181
        %p616 = pneg %p205
        %p617 = pneg %p202
        %p618 = pneg %p226
        %p619 = pneg %p223
        %p620 = pneg %p247
        %p621 = pneg %p244
        %p622 = pneg %p268
        %p623 = pneg %p265
        %p624 = pneg %p289
        %p625 = pneg %p286
        %p626 = pneg %p310
        %p627 = pneg %p307
        %p628 = pneg %p331
        %p629 = pneg %p328
        %p630 = pneg %p352
        %p631 = pneg %p349
        %p632 = pneg %p373
        %p633 = pneg %p370
        %p634 = pneg %p394
        %p635 = pneg %p391
        %p636 = pneg %p415
        %p637 = pneg %p412
        %p638 = pneg %p436
        %p639 = pneg %p433
        %p640 = pneg %p457
        %p641 = pneg %p454
        %p642 = pneg %p483
        %p643 = pneg %p480
        %p644 = scmp.lt.s32.totalorder %s32, 1
        %s645 = scalar_select %p644, %s32, 1
        %s646 = smul.addr %s645, 8
        %s647 = smul.addr %s646, 4
        %s648 = scalar_lea.vmem %s20, %s647
        %p649 = scmp.lt.s32.totalorder %s32, 1
        %s650 = scalar_select %p649, %s32, 1
        %s651 = smul.addr %s650, 8
        %s652 = smul.addr %s651, 4
        %s653 = scalar_lea.vmem %s0, %s652
        %p654 = scmp.lt.s32.totalorder %s32, 1
        %s655 = scalar_select %p654, %s32, 1
        %s656 = smul.addr %s655, 8
        %s657 = smul.addr %s656, 4
        %s658 = scalar_lea.vmem %s1, %s657
        %p659 = scmp.lt.s32.totalorder %s32, 1
        %s660 = scalar_select %p659, %s32, 1
        %s661 = smul.addr %s660, 8
        %s662 = smul.addr %s661, 4
        %s663 = scalar_lea.vmem %s20, %s662
        %v665 = vld [vmem:[%s653] sm:$0xff]
        %v666 = vld [vmem:[%s653 + $0x8] sm:$0xff]
        %v667 = vld [vmem:[%s653 + $0x10] sm:$0xff]
        %v668 = vld [vmem:[%s653 + $0x18] sm:$0xff]
        %v669 = vld [vmem:[%s658] sm:$0xff]
        %v670 = vld [vmem:[%s658 + $0x8] sm:$0xff]
        %v671 = vld [vmem:[%s658 + $0x10] sm:$0xff]
        %v672 = vld [vmem:[%s658 + $0x18] sm:$0xff]
        %v673 = vunpack.c.l.bf16 %v665
        %v674 = vunpack.c.h.bf16 %v665
        %v675 = vunpack.c.l.bf16 %v666
        %v676 = vunpack.c.h.bf16 %v666
        %v677 = vunpack.c.l.bf16 %v667
        %v678 = vunpack.c.h.bf16 %v667
        %v679 = vunpack.c.l.bf16 %v668
        %v680 = vunpack.c.h.bf16 %v668
        %v681 = vadd.f32 %v673, %v674
        %682 = vadd.xlane.f32.xlu0 %v681
        %v683 = vpop.xlane.xlu0 %682
        %v684 = vadd.f32 %v675, %v676
        %685 = vadd.xlane.f32.xlu0 %v684
        %v686 = vpop.xlane.xlu0 %685
        %v687 = vadd.f32 %v677, %v678
        %688 = vadd.xlane.f32.xlu0 %v687
        %v689 = vpop.xlane.xlu0 %688
        %v690 = vadd.f32 %v679, %v680
        %691 = vadd.xlane.f32.xlu0 %v690
        %v692 = vpop.xlane.xlu0 %691
        %v693 = vmul.f32 %v683, 0.00390625
        %v694 = vmul.f32 %v686, 0.00390625
        %v695 = vmul.f32 %v689, 0.00390625
        %v696 = vmul.f32 %v692, 0.00390625
        %v697 = vld [vmem:[%s2] sm:$0xff]
        %v698 = vld [vmem:[%s2 + $0x8] sm:$0xff]
        %v699 = vld [vmem:[%s2 + $0x10] sm:$0xff]
        %v700 = vld [vmem:[%s2 + $0x18] sm:$0xff]
        %v701 = vmul.f32 %v693, %v697
        %v702 = vmul.f32 %v694, %v698
        %v703 = vmul.f32 %v695, %v699
        %v704 = vmul.f32 %v696, %v700
        %vm705 = vcmask 15360
        %v706 = vsel %vm705, %v701, 0.0
        %v707 = vsel %vm705, %v702, 0.0
        %v708 = vadd.f32 %v706, %v707
        %v709 = vsel %vm705, %v703, 0.0
        %v710 = vadd.f32 %v708, %v709
        %v711 = vsel %vm705, %v704, 0.0
        %v712 = vadd.f32 %v710, %v711
        %v713 = vrot.slane %v712, 4
        %v714 = vadd.f32 %v712, %v713
        %v715 = vrot.slane %v714, 2
        %v716 = vadd.f32 %v714, %v715
        %v717 = vrot.slane %v716, 1
        %v718 = vadd.f32 %v716, %v717
        %v719 = vld [vmem:[%s3] sm:$0x1]
        %v720 = vadd.f32 %v718, %v719
        %v721 = vmax.f32 %v720, 0.0
        %v722 = vld [vmem:[%s4] sm:$0xff]
        %v723 = vld [vmem:[%s4 + $0x8] sm:$0xff]
        %v724 = vld [vmem:[%s4 + $0x10] sm:$0xff]
        %v725 = vld [vmem:[%s4 + $0x18] sm:$0xff]
        %v726 = vlaneseq
        %v727 = vshrl.u32 %v726, 7
        %v728 = vsub.s32 0, %v727
        %v729 = vrot.slane %v721, %v728
        %v730 = vmul.f32 %v722, %v729
        %v731 = vmul.f32 %v723, %v729
        %v732 = vmul.f32 %v724, %v729
        %v733 = vmul.f32 %v725, %v729
        %v734 = vsel %vm705, %v730, 0.0
        %735 = vadd.xlane.f32.xlu0 %v734
        %v736 = vpop.xlane.xlu0 %735
        %v737 = vsel %vm705, %v731, 0.0
        %738 = vadd.xlane.f32.xlu0 %v737
        %v739 = vpop.xlane.xlu0 %738
        %v740 = vsel %vm705, %v732, 0.0
        %741 = vadd.xlane.f32.xlu0 %v740
        %v742 = vpop.xlane.xlu0 %741
        %v743 = vsel %vm705, %v733, 0.0
        %744 = vadd.xlane.f32.xlu0 %v743
        %v745 = vpop.xlane.xlu0 %744
        %v746 = vld [vmem:[%s5] sm:$0xff]
        %v747 = vld [vmem:[%s5 + $0x8] sm:$0xff]
        %v748 = vld [vmem:[%s5 + $0x10] sm:$0xff]
        %v749 = vld [vmem:[%s5 + $0x18] sm:$0xff]
        %v750 = vadd.f32 %v736, %v746
        %v751 = vadd.f32 %v739, %v747
        %v752 = vadd.f32 %v742, %v748
        %v753 = vadd.f32 %v745, %v749
        %v754 = vxor.u32 %v750, 2147483648
        %v755 = vxor.u32 %v751, 2147483648
        %v756 = vxor.u32 %v752, 2147483648
        %v757 = vxor.u32 %v753, 2147483648
        %v758 = vmul.f32 %v754, 1.442695
        %v759 = vpow.pop %v758
        %v760 = vmul.f32 %v755, 1.442695
        %v761 = vpow.pop %v760
        %v762 = vmul.f32 %v756, 1.442695
        %v763 = vpow.pop %v762
        %v764 = vmul.f32 %v757, 1.442695
        %v765 = vpow.pop %v764
        %v766 = vadd.f32 %v759, 1.0
        %v767 = vadd.f32 %v761, 1.0
        %v768 = vadd.f32 %v763, 1.0
        %v769 = vadd.f32 %v765, 1.0
        %v770 = vrcp.pop %v766
        %v771 = vmul.f32 1.0, %v770
        %v772 = vrcp.pop %v767
        %v773 = vmul.f32 1.0, %v772
        %v774 = vrcp.pop %v768
        %v775 = vmul.f32 1.0, %v774
        %v776 = vrcp.pop %v769
        %v777 = vmul.f32 1.0, %v776
        %v778 = vunpack.c.l.bf16 %v669
        %v779 = vunpack.c.h.bf16 %v669
        %v780 = vunpack.c.l.bf16 %v670
        %v781 = vunpack.c.h.bf16 %v670
        %v782 = vunpack.c.l.bf16 %v671
        %v783 = vunpack.c.h.bf16 %v671
        %v784 = vunpack.c.l.bf16 %v672
        %v785 = vunpack.c.h.bf16 %v672
        %v786 = vadd.f32 %v778, %v779
        %787 = vadd.xlane.f32.xlu0 %v786
        %v788 = vpop.xlane.xlu0 %787
        %v789 = vadd.f32 %v780, %v781
        %790 = vadd.xlane.f32.xlu0 %v789
        %v791 = vpop.xlane.xlu0 %790
        %v792 = vadd.f32 %v782, %v783
        %793 = vadd.xlane.f32.xlu0 %v792
        %v794 = vpop.xlane.xlu0 %793
        %v795 = vadd.f32 %v784, %v785
        %796 = vadd.xlane.f32.xlu0 %v795
        %v797 = vpop.xlane.xlu0 %796
        %v798 = vmul.f32 %v788, 0.00390625
        %v799 = vmul.f32 %v791, 0.00390625
        %v800 = vmul.f32 %v794, 0.00390625
        %v801 = vmul.f32 %v797, 0.00390625
        %v802 = vld [vmem:[%s7] sm:$0xff]
        %v803 = vld [vmem:[%s7 + $0x8] sm:$0xff]
        %v804 = vld [vmem:[%s7 + $0x10] sm:$0xff]
        %v805 = vld [vmem:[%s7 + $0x18] sm:$0xff]
        %v806 = vmul.f32 %v798, %v802
        %v807 = vmul.f32 %v799, %v803
        %v808 = vmul.f32 %v800, %v804
        %v809 = vmul.f32 %v801, %v805
        %v810 = vsel %vm705, %v806, 0.0
        %v811 = vsel %vm705, %v807, 0.0
        %v812 = vadd.f32 %v810, %v811
        %v813 = vsel %vm705, %v808, 0.0
        %v814 = vadd.f32 %v812, %v813
        %v815 = vsel %vm705, %v809, 0.0
        %v816 = vadd.f32 %v814, %v815
        %v817 = vrot.slane %v816, 4
        %v818 = vadd.f32 %v816, %v817
        %v819 = vrot.slane %v818, 2
        %v820 = vadd.f32 %v818, %v819
        %v821 = vrot.slane %v820, 1
        %v822 = vadd.f32 %v820, %v821
        %v823 = vld [vmem:[%s8] sm:$0x1]
        %v824 = vadd.f32 %v822, %v823
        %v825 = vmax.f32 %v824, 0.0
        %v826 = vld [vmem:[%s9] sm:$0xff]
        %v827 = vld [vmem:[%s9 + $0x8] sm:$0xff]
        %v828 = vld [vmem:[%s9 + $0x10] sm:$0xff]
        %v829 = vld [vmem:[%s9 + $0x18] sm:$0xff]
        %v830 = vlaneseq
        %v831 = vshrl.u32 %v830, 7
        %v832 = vsub.s32 0, %v831
        %v833 = vrot.slane %v825, %v832
        %v834 = vmul.f32 %v826, %v833
        %v835 = vmul.f32 %v827, %v833
        %v836 = vmul.f32 %v828, %v833
        %v837 = vmul.f32 %v829, %v833
        %v838 = vsel %vm705, %v834, 0.0
        %839 = vadd.xlane.f32.xlu0 %v838
        %v840 = vpop.xlane.xlu0 %839
        %v841 = vsel %vm705, %v835, 0.0
        %842 = vadd.xlane.f32.xlu0 %v841
        %v843 = vpop.xlane.xlu0 %842
        %v844 = vsel %vm705, %v836, 0.0
        %845 = vadd.xlane.f32.xlu0 %v844
        %v846 = vpop.xlane.xlu0 %845
        %v847 = vsel %vm705, %v837, 0.0
        %848 = vadd.xlane.f32.xlu0 %v847
        %v849 = vpop.xlane.xlu0 %848
        %v850 = vld [vmem:[%s10] sm:$0xff]
        %v851 = vld [vmem:[%s10 + $0x8] sm:$0xff]
        %v852 = vld [vmem:[%s10 + $0x10] sm:$0xff]
        %v853 = vld [vmem:[%s10 + $0x18] sm:$0xff]
        %v854 = vadd.f32 %v840, %v850
        %v855 = vadd.f32 %v843, %v851
        %v856 = vadd.f32 %v846, %v852
        %v857 = vadd.f32 %v849, %v853
        %v858 = vxor.u32 %v854, 2147483648
        %v859 = vxor.u32 %v855, 2147483648
        %v860 = vxor.u32 %v856, 2147483648
        %v861 = vxor.u32 %v857, 2147483648
        %v862 = vmul.f32 %v858, 1.442695
        %v863 = vpow.pop %v862
        %v864 = vmul.f32 %v859, 1.442695
        %v865 = vpow.pop %v864
        %v866 = vmul.f32 %v860, 1.442695
        %v867 = vpow.pop %v866
        %v868 = vmul.f32 %v861, 1.442695
        %v869 = vpow.pop %v868
        %v870 = vadd.f32 %v863, 1.0
        %v871 = vadd.f32 %v865, 1.0
        %v872 = vadd.f32 %v867, 1.0
        %v873 = vadd.f32 %v869, 1.0
        %v874 = vrcp.pop %v870
        %v875 = vmul.f32 1.0, %v874
        %v876 = vrcp.pop %v871
        %v877 = vmul.f32 1.0, %v876
        %v878 = vrcp.pop %v872
        %v879 = vmul.f32 1.0, %v878
        %v880 = vrcp.pop %v873
        %v881 = vmul.f32 1.0, %v880
        %s882 = sld [smem:[#allocation3]]
        %v883 = vld [vmem:[%s6] sm:$0xff]
        %v884 = vld [vmem:[%s6 + $0x8] sm:$0xff]
        %v885 = vld [vmem:[%s6 + $0x10] sm:$0xff]
        %v886 = vld [vmem:[%s6 + $0x18] sm:$0xff]
        %888 = vset.pattern.permute.xlu0 0
        %889 = vperm.xlu0 %888, %v883
        %v890 = vpop.permute.xlu0 %889
        %893 = vset.pattern.permute.xlu0 0
        %894 = vperm.xlu0 %893, %v884
        %v895 = vpop.permute.xlu0 %894
        %898 = vset.pattern.permute.xlu0 0
        %899 = vperm.xlu0 %898, %v885
        %v900 = vpop.permute.xlu0 %899
        %903 = vset.pattern.permute.xlu0 0
        %904 = vperm.xlu0 %903, %v886
        %v905 = vpop.permute.xlu0 %904
        %v907 = vmul.f32 %v673, %v890
        %v908 = vmul.f32 %v674, %v890
        %v909 = vmul.f32 %v675, %v895
        %v910 = vmul.f32 %v676, %v895
        %v911 = vmul.f32 %v677, %v900
        %v912 = vmul.f32 %v678, %v900
        %v913 = vmul.f32 %v679, %v905
        %v914 = vmul.f32 %v680, %v905
        %v915 = vadd.f32 %v907, %v909
        %v916 = vadd.f32 %v915, %v911
        %v917 = vadd.f32 %v916, %v913
        %v918 = vrot.slane %v917, 4
        %v919 = vadd.f32 %v917, %v918
        %v920 = vrot.slane %v919, 2
        %v921 = vadd.f32 %v919, %v920
        %v922 = vrot.slane %v921, 1
        %v923 = vadd.f32 %v921, %v922
        %v924 = vadd.f32 %v908, %v910
        %v925 = vadd.f32 %v924, %v912
        %v926 = vadd.f32 %v925, %v914
        %v927 = vrot.slane %v926, 4
        %v928 = vadd.f32 %v926, %v927
        %v929 = vrot.slane %v928, 2
        %v930 = vadd.f32 %v928, %v929
        %v931 = vrot.slane %v930, 1
        %v932 = vadd.f32 %v930, %v931
        %v933 = vstv %s882
        %v934 = vadd.f32 %v923, %v933
        %v935 = vadd.f32 %v932, %v933
        %v936 = vxor.u32 %v934, 2147483648
        %v937 = vxor.u32 %v935, 2147483648
        %v938 = vmul.f32 %v936, 1.442695
        %v939 = vpow.pop %v938
        %v940 = vmul.f32 %v937, 1.442695
        %v941 = vpow.pop %v940
        %v942 = vadd.f32 %v939, 1.0
        %v943 = vadd.f32 %v941, 1.0
        %v944 = vrcp.pop %v942
        %v945 = vmul.f32 1.0, %v944
        %v946 = vrcp.pop %v943
        %v947 = vmul.f32 1.0, %v946
        %s948 = sld [smem:[#allocation3 + $0x1]]
        %v949 = vld [vmem:[%s11] sm:$0xff]
        %v950 = vld [vmem:[%s11 + $0x8] sm:$0xff]
        %v951 = vld [vmem:[%s11 + $0x10] sm:$0xff]
        %v952 = vld [vmem:[%s11 + $0x18] sm:$0xff]
        %954 = vset.pattern.permute.xlu0 0
        %955 = vperm.xlu0 %954, %v949
        %v956 = vpop.permute.xlu0 %955
        %959 = vset.pattern.permute.xlu0 0
        %960 = vperm.xlu0 %959, %v950
        %v961 = vpop.permute.xlu0 %960
        %964 = vset.pattern.permute.xlu0 0
        %965 = vperm.xlu0 %964, %v951
        %v966 = vpop.permute.xlu0 %965
        %969 = vset.pattern.permute.xlu0 0
        %970 = vperm.xlu0 %969, %v952
        %v971 = vpop.permute.xlu0 %970
        %v973 = vmul.f32 %v778, %v956
        %v974 = vmul.f32 %v779, %v956
        %v975 = vmul.f32 %v780, %v961
        %v976 = vmul.f32 %v781, %v961
        %v977 = vmul.f32 %v782, %v966
        %v978 = vmul.f32 %v783, %v966
        %v979 = vmul.f32 %v784, %v971
        %v980 = vmul.f32 %v785, %v971
        %v981 = vadd.f32 %v973, %v975
        %v982 = vadd.f32 %v981, %v977
        %v983 = vadd.f32 %v982, %v979
        %v984 = vrot.slane %v983, 4
        %v985 = vadd.f32 %v983, %v984
        %v986 = vrot.slane %v985, 2
        %v987 = vadd.f32 %v985, %v986
        %v988 = vrot.slane %v987, 1
        %v989 = vadd.f32 %v987, %v988
        %v990 = vadd.f32 %v974, %v976
        %v991 = vadd.f32 %v990, %v978
        %v992 = vadd.f32 %v991, %v980
        %v993 = vrot.slane %v992, 4
        %v994 = vadd.f32 %v992, %v993
        %v995 = vrot.slane %v994, 2
        %v996 = vadd.f32 %v994, %v995
        %v997 = vrot.slane %v996, 1
        %v998 = vadd.f32 %v996, %v997
        %v999 = vstv %s948
        %v1000 = vadd.f32 %v989, %v999
        %v1001 = vadd.f32 %v998, %v999
        %v1002 = vxor.u32 %v1000, 2147483648
        %v1003 = vxor.u32 %v1001, 2147483648
        %v1004 = vmul.f32 %v1002, 1.442695
        %v1005 = vpow.pop %v1004
        %v1006 = vmul.f32 %v1003, 1.442695
        %v1007 = vpow.pop %v1006
        %v1008 = vadd.f32 %v1005, 1.0
        %v1009 = vadd.f32 %v1007, 1.0
        %v1010 = vrcp.pop %v1008
        %v1011 = vmul.f32 1.0, %v1010
        %v1012 = vrcp.pop %v1009
        %v1013 = vmul.f32 1.0, %v1012
        %1015 = vset.pattern.permute.xlu0 0
        %1016 = vperm.xlu0 %1015, %v771
        %v1017 = vpop.permute.xlu0 %1016
        %1020 = vset.pattern.permute.xlu0 0
        %1021 = vperm.xlu0 %1020, %v773
        %v1022 = vpop.permute.xlu0 %1021
        %1025 = vset.pattern.permute.xlu0 0
        %1026 = vperm.xlu0 %1025, %v775
        %v1027 = vpop.permute.xlu0 %1026
        %1030 = vset.pattern.permute.xlu0 0
        %1031 = vperm.xlu0 %1030, %v777
        %v1032 = vpop.permute.xlu0 %1031
        %v1034 = vadd.f32 %v1017, %v945
        %v1035 = vadd.f32 %v1017, %v947
        %v1036 = vadd.f32 %v1022, %v945
        %v1037 = vadd.f32 %v1022, %v947
        %v1038 = vadd.f32 %v1027, %v945
        %v1039 = vadd.f32 %v1027, %v947
        %v1040 = vadd.f32 %v1032, %v945
        %v1041 = vadd.f32 %v1032, %v947
        %v1042 = vpack.c.bf16 %v1036, %v1034
        %v1043 = vpack.c.bf16 %v1037, %v1035
        %v1044 = vpack.c.bf16 %v1040, %v1038
        %v1045 = vpack.c.bf16 %v1041, %v1039
        %v1050 = vunpack.c.l.b16 %v1042
        %v1051 = vunpack.c.l.b16 %v1043
        %v1052 = vunpack.c.h.b16 %v1042
        %v1053 = vunpack.c.h.b16 %v1043
        %v1054 = vunpack.c.l.b16 %v1044
        %v1055 = vunpack.c.l.b16 %v1045
        %v1056 = vunpack.c.h.b16 %v1044
        %v1057 = vunpack.c.h.b16 %v1045
        %v1058 = vpack.c.b16 %v1051, %v1050
        %v1059 = vpack.c.b16 %v1053, %v1052
        %v1060 = vpack.c.b16 %v1055, %v1054
        %v1061 = vpack.c.b16 %v1057, %v1056
        %v1066 = vmul.bf16 %v665, %v1058
        %v1067 = vmul.bf16 %v666, %v1059
        %v1068 = vmul.bf16 %v667, %v1060
        %v1069 = vmul.bf16 %v668, %v1061
        %v1074 = vunpack.c.l.b16 %v1066
        %v1075 = vunpack.c.h.b16 %v1066
        %v1076 = vunpack.c.l.b16 %v1067
        %v1077 = vunpack.c.h.b16 %v1067
        %v1078 = vunpack.c.l.b16 %v1068
        %v1079 = vunpack.c.h.b16 %v1068
        %v1080 = vunpack.c.l.b16 %v1069
        %v1081 = vunpack.c.h.b16 %v1069
        %v1082 = vpack.c.b16 %v1076, %v1074
        %v1083 = vpack.c.b16 %v1077, %v1075
        %v1084 = vpack.c.b16 %v1080, %v1078
        %v1085 = vpack.c.b16 %v1081, %v1079
        %1090 = vst [vmem:[#allocation2] sm:$0xff] %v1082
        %1091 = vst [vmem:[#allocation2 + $0x8] sm:$0xff] %v1083
        %1092 = vst [vmem:[#allocation2 + $0x10] sm:$0xff] %v1084
        %1093 = vst [vmem:[#allocation2 + $0x18] sm:$0xff] %v1085
        %1095 = vset.pattern.permute.xlu0 0
        %1096 = vperm.xlu0 %1095, %v875
        %v1097 = vpop.permute.xlu0 %1096
        %1100 = vset.pattern.permute.xlu0 0
        %1101 = vperm.xlu0 %1100, %v877
        %v1102 = vpop.permute.xlu0 %1101
        %1105 = vset.pattern.permute.xlu0 0
        %1106 = vperm.xlu0 %1105, %v879
        %v1107 = vpop.permute.xlu0 %1106
        %1110 = vset.pattern.permute.xlu0 0
        %1111 = vperm.xlu0 %1110, %v881
        %v1112 = vpop.permute.xlu0 %1111
        %v1114 = vadd.f32 %v1097, %v1011
        %v1115 = vadd.f32 %v1097, %v1013
        %v1116 = vadd.f32 %v1102, %v1011
        %v1117 = vadd.f32 %v1102, %v1013
        %v1118 = vadd.f32 %v1107, %v1011
        %v1119 = vadd.f32 %v1107, %v1013
        %v1120 = vadd.f32 %v1112, %v1011
        %v1121 = vadd.f32 %v1112, %v1013
        %v1122 = vpack.c.bf16 %v1116, %v1114
        %v1123 = vpack.c.bf16 %v1117, %v1115
        %v1124 = vpack.c.bf16 %v1120, %v1118
        %v1125 = vpack.c.bf16 %v1121, %v1119
        %v1130 = vunpack.c.l.b16 %v1122
        %v1131 = vunpack.c.l.b16 %v1123
        %v1132 = vunpack.c.h.b16 %v1122
        %v1133 = vunpack.c.h.b16 %v1123
        %v1134 = vunpack.c.l.b16 %v1124
        %v1135 = vunpack.c.l.b16 %v1125
        %v1136 = vunpack.c.h.b16 %v1124
        %v1137 = vunpack.c.h.b16 %v1125
        %v1138 = vpack.c.b16 %v1131, %v1130
        %v1139 = vpack.c.b16 %v1133, %v1132
        %v1140 = vpack.c.b16 %v1135, %v1134
        %v1141 = vpack.c.b16 %v1137, %v1136
        %v1146 = vmul.bf16 %v669, %v1138
        %v1147 = vmul.bf16 %v670, %v1139
        %v1148 = vmul.bf16 %v671, %v1140
        %v1149 = vmul.bf16 %v672, %v1141
        %v1154 = vunpack.c.l.b16 %v1146
        %v1155 = vunpack.c.h.b16 %v1146
        %v1156 = vunpack.c.l.b16 %v1147
        %v1157 = vunpack.c.h.b16 %v1147
        %v1158 = vunpack.c.l.b16 %v1148
        %v1159 = vunpack.c.h.b16 %v1148
        %v1160 = vunpack.c.l.b16 %v1149
        %v1161 = vunpack.c.h.b16 %v1149
        %v1162 = vpack.c.b16 %v1156, %v1154
        %v1163 = vpack.c.b16 %v1157, %v1155
        %v1164 = vpack.c.b16 %v1160, %v1158
        %v1165 = vpack.c.b16 %v1161, %v1159
        %1170 = vst [vmem:[#allocation2 + $0x20] sm:$0xff] %v1162
        %1171 = vst [vmem:[#allocation2 + $0x28] sm:$0xff] %v1163
        %1172 = vst [vmem:[#allocation2 + $0x30] sm:$0xff] %v1164
        %1173 = vst [vmem:[#allocation2 + $0x38] sm:$0xff] %v1165
        %v1174 = vld [vmem:[%s17] sm:$0xf]
        %v1175 = vld [vmem:[%s17 + $0x4] sm:$0xf]
        %v1176 = vld [vmem:[%s17 + $0x8] sm:$0xf]
        %v1177 = vld [vmem:[%s17 + $0xc] sm:$0xf]
        %v1178 = vld [vmem:[#allocation2] sm:$0xff]
        %v1179 = vld [vmem:[#allocation2 + $0x8] sm:$0xff]
        %v1180 = vld [vmem:[#allocation2 + $0x10] sm:$0xff]
        %v1181 = vld [vmem:[#allocation2 + $0x18] sm:$0xff]
        %v1182 = vld [vmem:[#allocation2 + $0x20] sm:$0xff]
        %v1183 = vld [vmem:[#allocation2 + $0x28] sm:$0xff]
        %v1184 = vld [vmem:[#allocation2 + $0x30] sm:$0xff]
        %v1185 = vld [vmem:[#allocation2 + $0x38] sm:$0xff]
        %v1186 = vld [vmem:[%s18] sm:$0xff]
        %v1187 = vld [vmem:[%s18 + $0x8] sm:$0xff]
        %v1188 = vld [vmem:[%s18 + $0x10] sm:$0xff]
        %v1189 = vld [vmem:[%s18 + $0x18] sm:$0xff]
        %1191 = vset.pattern.permute.xlu0 0
        %1192 = vperm.xlu0 %1191, %v1186
        %v1193 = vpop.permute.xlu0 %1192
        %1196 = vset.pattern.permute.xlu0 0
        %1197 = vperm.xlu0 %1196, %v1187
        %v1198 = vpop.permute.xlu0 %1197
        %1201 = vset.pattern.permute.xlu0 0
        %1202 = vperm.xlu0 %1201, %v1188
        %v1203 = vpop.permute.xlu0 %1202
        %1206 = vset.pattern.permute.xlu0 0
        %1207 = vperm.xlu0 %1206, %v1189
        %v1208 = vpop.permute.xlu0 %1207
        %v1214 = vunpack.c.l.b16 %v1174
        %v1215 = vunpack.c.l.b16 %v1175
        %v1216 = vunpack.c.l.b16 %v1176
        %v1217 = vunpack.c.l.b16 %v1177
        %v1218 = vpack.c.b16 %v1215, %v1214
        %v1219 = vpack.c.b16 %v1217, %v1216
        %vm1220 = vcmask 523264
        %v1222 = vsel %vm1220, %v1218, 0
        %v1225 = vsel %vm1220, %v1219, 0
        %1227 = vmatprep.subr.bf16.mxu0 %v1179
        %1228 = vmatpush1.bf16.msra.mxu0 %v1178
        %1229 = vmatprep.subr.bf16.mxu0 %v1181
        %1230 = vmatpush1.bf16.msra.mxu0 %v1180
        %1231 = vmatprep.subr.bf16.mxu0 %v1183
        %1232 = vmatpush1.bf16.msra.mxu0 %v1182
        %1233 = vmatprep.subr.bf16.mxu0 %v1185
        %1234 = vmatpush1.bf16.msra.mxu0 %v1184
        %1235 = vmatprep.subr.bf16.mxu0 0
        %1236 = vmatpush1.bf16.msra.mxu0 0
        %1237 = vmatprep.subr.bf16.mxu0 0
        %1238 = vmatpush1.bf16.msra.mxu0 0
        %1239 = vmatprep.subr.bf16.mxu0 0
        %1240 = vmatpush1.bf16.msra.mxu0 0
        %1241 = vmatprep.subr.bf16.mxu0 0
        %1242 = vmatpush1.bf16.msra.mxu0 0
        %1243 = vmatprep.subr.bf16.mxu0 0
        %1244 = vmatpush1.bf16.msra.mxu0 0
        %1245 = vmatprep.subr.bf16.mxu0 0
        %1246 = vmatpush1.bf16.msra.mxu0 0
        %1247 = vmatprep.subr.bf16.mxu0 0
        %1248 = vmatpush1.bf16.msra.mxu0 0
        %1249 = vmatprep.subr.bf16.mxu0 0
        %1250 = vmatpush1.bf16.msra.mxu0 0
        %1251 = vmatprep.subr.bf16.mxu0 0
        %1252 = vmatpush1.bf16.msra.mxu0 0
        %1253 = vmatprep.subr.bf16.mxu0 0
        %1254 = vmatpush1.bf16.msra.mxu0 0
        %1255 = vmatprep.subr.bf16.mxu0 0
        %1256 = vmatpush1.bf16.msra.mxu0 0
        %1257 = vmatprep.subr.bf16.mxu0 0
        %1258 = vmatpush1.bf16.msra.mxu0 0
        %1259 = vmatprep.mubr.bf16.mxu0 0
        %1260 = vmatmul.mubr.bf16.gmra.mrb[0].mxu0 %v1222
        %v1261 = vpop.f32.mrb[0].mxu0
        %v1262 = vadd.f32 %v1193, %v1261
        %v1263 = vpop.f32.mrb[0].mxu0
        %v1264 = vadd.f32 %v1193, %v1263
        %v1265 = vpop.f32.mrb[0].mxu0
        %v1266 = vadd.f32 %v1198, %v1265
        %v1267 = vpop.f32.mrb[0].mxu0
        %v1268 = vadd.f32 %v1198, %v1267
        %1269 = vmatprep.mubr.bf16.mxu0 0
        %1270 = vmatmul.mubr.bf16.gmra.mrb[0].mxu0 %v1225
        %v1271 = vpop.f32.mrb[0].mxu0
        %v1272 = vadd.f32 %v1203, %v1271
        %v1273 = vpop.f32.mrb[0].mxu0
        %v1274 = vadd.f32 %v1203, %v1273
        %v1275 = vpop.f32.mrb[0].mxu0
        %v1276 = vadd.f32 %v1208, %v1275
        %v1277 = vpop.f32.mrb[0].mxu0
        %v1278 = vadd.f32 %v1208, %v1277
        %1279 = vdwg.mxu0
        %v1280 = vmax.f32 %v1262, 0.0
        %v1281 = vmax.f32 %v1264, 0.0
        %v1282 = vmax.f32 %v1266, 0.0
        %v1283 = vmax.f32 %v1268, 0.0
        %v1284 = vmax.f32 %v1272, 0.0
        %v1285 = vmax.f32 %v1274, 0.0
        %v1286 = vmax.f32 %v1276, 0.0
        %v1287 = vmax.f32 %v1278, 0.0
        %v1288 = vadd.f32 %v1280, %v1281
        %1289 = vadd.xlane.f32.xlu0 %v1288
        %v1290 = vpop.xlane.xlu0 %1289
        %v1291 = vadd.f32 %v1282, %v1283
        %1292 = vadd.xlane.f32.xlu0 %v1291
        %v1293 = vpop.xlane.xlu0 %1292
        %v1294 = vadd.f32 %v1284, %v1285
        %1295 = vadd.xlane.f32.xlu0 %v1294
        %v1296 = vpop.xlane.xlu0 %1295
        %v1297 = vadd.f32 %v1286, %v1287
        %1298 = vadd.xlane.f32.xlu0 %v1297
        %v1299 = vpop.xlane.xlu0 %1298
        %v1300 = vmul.f32 %v1290, 0.00390625
        %v1301 = vmul.f32 %v1293, 0.00390625
        %v1302 = vmul.f32 %v1296, 0.00390625
        %v1303 = vmul.f32 %v1299, 0.00390625
        %v1304 = vld [vmem:[%s12] sm:$0xff]
        %v1305 = vld [vmem:[%s12 + $0x8] sm:$0xff]
        %v1306 = vld [vmem:[%s12 + $0x10] sm:$0xff]
        %v1307 = vld [vmem:[%s12 + $0x18] sm:$0xff]
        %v1308 = vmul.f32 %v1300, %v1304
        %v1309 = vmul.f32 %v1301, %v1305
        %v1310 = vmul.f32 %v1302, %v1306
        %v1311 = vmul.f32 %v1303, %v1307
        %v1312 = vsel %vm705, %v1308, 0.0
        %v1313 = vsel %vm705, %v1309, 0.0
        %v1314 = vadd.f32 %v1312, %v1313
        %v1315 = vsel %vm705, %v1310, 0.0
        %v1316 = vadd.f32 %v1314, %v1315
        %v1317 = vsel %vm705, %v1311, 0.0
        %v1318 = vadd.f32 %v1316, %v1317
        %v1319 = vrot.slane %v1318, 4
        %v1320 = vadd.f32 %v1318, %v1319
        %v1321 = vrot.slane %v1320, 2
        %v1322 = vadd.f32 %v1320, %v1321
        %v1323 = vrot.slane %v1322, 1
        %v1324 = vadd.f32 %v1322, %v1323
        %v1325 = vld [vmem:[%s13] sm:$0x1]
        %v1326 = vadd.f32 %v1324, %v1325
        %v1327 = vmax.f32 %v1326, 0.0
        %v1328 = vld [vmem:[%s14] sm:$0xff]
        %v1329 = vld [vmem:[%s14 + $0x8] sm:$0xff]
        %v1330 = vld [vmem:[%s14 + $0x10] sm:$0xff]
        %v1331 = vld [vmem:[%s14 + $0x18] sm:$0xff]
        %v1332 = vlaneseq
        %v1333 = vshrl.u32 %v1332, 7
        %v1334 = vsub.s32 0, %v1333
        %v1335 = vrot.slane %v1327, %v1334
        %v1336 = vmul.f32 %v1328, %v1335
        %v1337 = vmul.f32 %v1329, %v1335
        %v1338 = vmul.f32 %v1330, %v1335
        %v1339 = vmul.f32 %v1331, %v1335
        %v1340 = vsel %vm705, %v1336, 0.0
        %1341 = vadd.xlane.f32.xlu0 %v1340
        %v1342 = vpop.xlane.xlu0 %1341
        %v1343 = vsel %vm705, %v1337, 0.0
        %1344 = vadd.xlane.f32.xlu0 %v1343
        %v1345 = vpop.xlane.xlu0 %1344
        %v1346 = vsel %vm705, %v1338, 0.0
        %1347 = vadd.xlane.f32.xlu0 %v1346
        %v1348 = vpop.xlane.xlu0 %1347
        %v1349 = vsel %vm705, %v1339, 0.0
        %1350 = vadd.xlane.f32.xlu0 %v1349
        %v1351 = vpop.xlane.xlu0 %1350
        %v1352 = vld [vmem:[%s15] sm:$0xff]
        %v1353 = vld [vmem:[%s15 + $0x8] sm:$0xff]
        %v1354 = vld [vmem:[%s15 + $0x10] sm:$0xff]
        %v1355 = vld [vmem:[%s15 + $0x18] sm:$0xff]
        %v1356 = vadd.f32 %v1342, %v1352
        %v1357 = vadd.f32 %v1345, %v1353
        %v1358 = vadd.f32 %v1348, %v1354
        %v1359 = vadd.f32 %v1351, %v1355
        %v1360 = vxor.u32 %v1356, 2147483648
        %v1361 = vxor.u32 %v1357, 2147483648
        %v1362 = vxor.u32 %v1358, 2147483648
        %v1363 = vxor.u32 %v1359, 2147483648
        %v1364 = vmul.f32 %v1360, 1.442695
        %v1365 = vpow.pop %v1364
        %v1366 = vmul.f32 %v1361, 1.442695
        %v1367 = vpow.pop %v1366
        %v1368 = vmul.f32 %v1362, 1.442695
        %v1369 = vpow.pop %v1368
        %v1370 = vmul.f32 %v1363, 1.442695
        %v1371 = vpow.pop %v1370
        %v1372 = vadd.f32 %v1365, 1.0
        %v1373 = vadd.f32 %v1367, 1.0
        %v1374 = vadd.f32 %v1369, 1.0
        %v1375 = vadd.f32 %v1371, 1.0
        %v1376 = vrcp.pop %v1372
        %v1377 = vmul.f32 1.0, %v1376
        %v1378 = vrcp.pop %v1373
        %v1379 = vmul.f32 1.0, %v1378
        %v1380 = vrcp.pop %v1374
        %v1381 = vmul.f32 1.0, %v1380
        %v1382 = vrcp.pop %v1375
        %v1383 = vmul.f32 1.0, %v1382
        %s1384 = sld [smem:[#allocation3 + $0x2]]
        %v1385 = vld [vmem:[%s16] sm:$0xff]
        %v1386 = vld [vmem:[%s16 + $0x8] sm:$0xff]
        %v1387 = vld [vmem:[%s16 + $0x10] sm:$0xff]
        %v1388 = vld [vmem:[%s16 + $0x18] sm:$0xff]
        %1390 = vset.pattern.permute.xlu0 0
        %1391 = vperm.xlu0 %1390, %v1385
        %v1392 = vpop.permute.xlu0 %1391
        %1395 = vset.pattern.permute.xlu0 0
        %1396 = vperm.xlu0 %1395, %v1386
        %v1397 = vpop.permute.xlu0 %1396
        %1400 = vset.pattern.permute.xlu0 0
        %1401 = vperm.xlu0 %1400, %v1387
        %v1402 = vpop.permute.xlu0 %1401
        %1405 = vset.pattern.permute.xlu0 0
        %1406 = vperm.xlu0 %1405, %v1388
        %v1407 = vpop.permute.xlu0 %1406
        %v1409 = vmul.f32 %v1280, %v1392
        %v1410 = vmul.f32 %v1281, %v1392
        %v1411 = vmul.f32 %v1282, %v1397
        %v1412 = vmul.f32 %v1283, %v1397
        %v1413 = vmul.f32 %v1284, %v1402
        %v1414 = vmul.f32 %v1285, %v1402
        %v1415 = vmul.f32 %v1286, %v1407
        %v1416 = vmul.f32 %v1287, %v1407
        %v1417 = vadd.f32 %v1409, %v1411
        %v1418 = vadd.f32 %v1417, %v1413
        %v1419 = vadd.f32 %v1418, %v1415
        %v1420 = vrot.slane %v1419, 4
        %v1421 = vadd.f32 %v1419, %v1420
        %v1422 = vrot.slane %v1421, 2
        %v1423 = vadd.f32 %v1421, %v1422
        %v1424 = vrot.slane %v1423, 1
        %v1425 = vadd.f32 %v1423, %v1424
        %v1426 = vadd.f32 %v1410, %v1412
        %v1427 = vadd.f32 %v1426, %v1414
        %v1428 = vadd.f32 %v1427, %v1416
        %v1429 = vrot.slane %v1428, 4
        %v1430 = vadd.f32 %v1428, %v1429
        %v1431 = vrot.slane %v1430, 2
        %v1432 = vadd.f32 %v1430, %v1431
        %v1433 = vrot.slane %v1432, 1
        %v1434 = vadd.f32 %v1432, %v1433
        %v1435 = vstv %s1384
        %v1436 = vadd.f32 %v1425, %v1435
        %v1437 = vadd.f32 %v1434, %v1435
        %v1438 = vxor.u32 %v1436, 2147483648
        %v1439 = vxor.u32 %v1437, 2147483648
        %v1440 = vmul.f32 %v1438, 1.442695
        %v1441 = vpow.pop %v1440
        %v1442 = vmul.f32 %v1439, 1.442695
        %v1443 = vpow.pop %v1442
        %v1444 = vadd.f32 %v1441, 1.0
        %v1445 = vadd.f32 %v1443, 1.0
        %v1446 = vrcp.pop %v1444
        %v1447 = vmul.f32 1.0, %v1446
        %v1448 = vrcp.pop %v1445
        %v1449 = vmul.f32 1.0, %v1448
        %1451 = vset.pattern.permute.xlu0 0
        %1452 = vperm.xlu0 %1451, %v1377
        %v1453 = vpop.permute.xlu0 %1452
        %1456 = vset.pattern.permute.xlu0 0
        %1457 = vperm.xlu0 %1456, %v1379
        %v1458 = vpop.permute.xlu0 %1457
        %1461 = vset.pattern.permute.xlu0 0
        %1462 = vperm.xlu0 %1461, %v1381
        %v1463 = vpop.permute.xlu0 %1462
        %1466 = vset.pattern.permute.xlu0 0
        %1467 = vperm.xlu0 %1466, %v1383
        %v1468 = vpop.permute.xlu0 %1467
        %v1470 = vadd.f32 %v1453, %v1447
        %v1471 = vadd.f32 %v1453, %v1449
        %v1472 = vadd.f32 %v1458, %v1447
        %v1473 = vadd.f32 %v1458, %v1449
        %v1474 = vadd.f32 %v1463, %v1447
        %v1475 = vadd.f32 %v1463, %v1449
        %v1476 = vadd.f32 %v1468, %v1447
        %v1477 = vadd.f32 %v1468, %v1449
        %v1478 = vmul.f32 %v1280, %v1470
        %v1479 = vmul.f32 %v1281, %v1471
        %v1480 = vmul.f32 %v1282, %v1472
        %v1481 = vmul.f32 %v1283, %v1473
        %v1482 = vmul.f32 %v1284, %v1474
        %v1483 = vmul.f32 %v1285, %v1475
        %v1484 = vmul.f32 %v1286, %v1476
        %v1485 = vmul.f32 %v1287, %v1477
        %v1486 = vpack.c.bf16 %v1480, %v1478
        %v1487 = vpack.c.bf16 %v1481, %v1479
        %v1488 = vpack.c.bf16 %v1484, %v1482
        %v1489 = vpack.c.bf16 %v1485, %v1483
        %v1494 = vunpack.c.l.b16 %v1486
        %v1495 = vunpack.c.l.b16 %v1487
        %v1496 = vunpack.c.h.b16 %v1486
        %v1497 = vunpack.c.h.b16 %v1487
        %v1498 = vunpack.c.l.b16 %v1488
        %v1499 = vunpack.c.l.b16 %v1489
        %v1500 = vunpack.c.h.b16 %v1488
        %v1501 = vunpack.c.h.b16 %v1489
        %v1502 = vpack.c.b16 %v1495, %v1494
        %v1503 = vpack.c.b16 %v1497, %v1496
        %v1504 = vpack.c.b16 %v1499, %v1498
        %v1505 = vpack.c.b16 %v1501, %v1500
        %1510 = vst [vmem:[%s663] sm:$0xff] %v1502
        %1511 = vst [vmem:[%s663 + $0x8] sm:$0xff] %v1503
        %1512 = vst [vmem:[%s663 + $0x10] sm:$0xff] %v1504
        %1513 = vst [vmem:[%s663 + $0x18] sm:$0xff] %v1505
        %p1514 = scmp.lt.s32.totalorder %s32, 1
        %s1515 = scalar_select %p1514, %s32, 1
        %s1516 = smul.addr %s1515, 8
        %s1517 = smul.addr %s1516, 4
        %s1518 = scalar_lea.vmem %s20, %s1517
        // Predicated region
        $region105: #{_lambda_.1} parent=99 // pred_check
          %p1519 = pneg %p480
        $region106: #{_lambda_.1} parent=99 // pred_check_branch
          %1521 = sbr.rel (%p1519) target = $region108
        $region107: #{_lambda_.1} parent=99 // pred_region
          _
        $region108: #{_lambda_.1} parent=99 // pred_fallthru
          _
      $region100: #{_lambda_.1} parent=5 // pred_fallthru
        _
      %p1522 = scmp.le.s32.totalorder 2, %s27
      // Predicated region
      $region109: #{_lambda_.1} parent=5 // pred_check
        %p1523 = pneg %p1522
      $region110: #{_lambda_.1} parent=5 // pred_check_branch
        %1525 = sbr.rel (%p1523) target = $region112
      $region111: #{_lambda_.1} parent=5 // pred_region
        %s1526 = ssub.s32 %s27, 2
        // Predicated region
        $region113: #{_lambda_.1} parent=111 // pred_check
          %p1527 = pneg %p486
        $region114: #{_lambda_.1} parent=111 // pred_check_branch
          %1529 = sbr.rel (%p1527) target = $region116
        $region115: #{_lambda_.1} parent=111 // pred_region
          %p1530 = scmp.lt.s32.totalorder %s33, 1
          %s1531 = scalar_select %p1530, %s33, 1
          %s1532 = smul.addr %s1531, 8
          %s1533 = smul.addr %s1532, 4
          %s1534 = scalar_lea.vmem %s20, %s1533
        $region116: #{_lambda_.1} parent=111 // pred_fallthru
          _
      $region112: #{_lambda_.1} parent=5 // pred_fallthru
        _
    $region6: #{_lambda_.1} parent=1 // loop_footer
      %s31 = sadd.s32 1, %s27
    $region7: #{_lambda_.1} parent=1 // loop_footer_branch
      %26 = sbr.rel target = $region3
    $region8: #{_lambda_.1} parent=1 // loop_exit
      _
    %1535 = vsyncpa [#allocation4], 1
    %s1536 = scalar_lea.sflag [#allocation4], 1
    %1537 = vsyncpa %s1536, 1

</llo_original>
